<compile_context>
chip_gen: v5e
topology: v5e:2x2
jax: 0.10.0
libtpu: 0.0.40
codegen_flags: <defaults>
</compile_context>

<pallas_src>
import functools

import jax
import jax.numpy as jnp
from jax.experimental import pallas as pl
from jax.experimental.pallas import tpu as pltpu

EPS = 1e-5


def residual_block_kernel(x_ref, w1_ref, b1_ref, w2_ref, b2_ref, o_ref, *, H, W):
    # x_ref block: (1, C, H*W) -- channels on sublanes, flat spatial on lanes.
    _, C, HW = x_ref.shape
    assert HW == H * W
    x = x_ref[0].astype(jnp.float32)                      # (C, HW), lane-dense

    # Reflection-edge masks: computed once, reused by both convs (hoisted).
    flat = jax.lax.broadcasted_iota(jnp.int32, (C, HW), 1)
    col = flat % W
    top_row = flat < W
    bot_row = flat >= HW - W
    left_col = col == 0
    right_col = col == W - 1

    def roll_lanes(v, s):
        # out[c, k] = v[c, (k - s) % HW]   (numpy-roll semantics on the lane axis)
        s = s % HW
        if s == 0:
            return v
        return jnp.concatenate([v[:, HW - s:], v[:, :HW - s]], axis=1)

    def taps(a):
        """The 9 reflect-padded 3x3 tap planes of `a`, each (C, HW).

        taps(a)[kh*3 + kw][c, i*W + j] == a[c, refl(i+kh-1)*W + refl(j+kw-1)]
        with refl(-1) = 1, refl(H) = H-2  (torch ReflectionPad2d(1)).
        """
        up = roll_lanes(a, W)       # a[i-1, j]  (wraps at row 0 -> fixed below)
        dn = roll_lanes(a, -W)      # a[i+1, j]  (wraps at row H-1 -> fixed below)
        rows = (
            jnp.where(top_row, dn, up),   # kh=0: a[refl(i-1), j]
            a,                            # kh=1: a[i, j]
            jnp.where(bot_row, up, dn),   # kh=2: a[refl(i+1), j]
        )
        out = []
        for r in rows:
            lf = roll_lanes(r, 1)    # r[i, j-1]  (wraps at col 0 -> fixed below)
            rt = roll_lanes(r, -1)   # r[i, j+1]  (wraps at col W-1 -> fixed below)
            out.append(jnp.where(left_col, rt, lf))    # kw=0: r[i, refl(j-1)]
            out.append(r)                              # kw=1
            out.append(jnp.where(right_col, lf, rt))   # kw=2: r[i, refl(j+1)]
        return out

    def conv3x3(a, w_ref, b_ref):
        # a: (Cin, HW); w_ref: (9, Cout, Cin); b_ref: (Cout, 1)  ->  (Cout, HW) f32
        planes = taps(a)
        acc = jnp.zeros((C, HW), jnp.float32)
        for t in range(9):
            acc = acc + jnp.dot(
                w_ref[t].astype(jnp.float32), planes[t],
                preferred_element_type=jnp.float32)
        return acc + b_ref[...].astype(jnp.float32)

    def instance_norm(y):
        # Single-pass per-channel stats over the (lane) spatial axis.
        inv_n = 1.0 / HW
        s1 = jnp.sum(y, axis=1, keepdims=True)             # (C, 1)
        s2 = jnp.sum(y * y, axis=1, keepdims=True)          # (C, 1)
        mean = s1 * inv_n
        var = jnp.maximum(s2 * inv_n - mean * mean, 0.0)    # biased var (torch)
        return (y - mean) * jax.lax.rsqrt(var + EPS)

    # conv block 1: reflect-pad -> conv -> IN -> ReLU
    y = jnp.maximum(instance_norm(conv3x3(x, w1_ref, b1_ref)), 0.0)
    # conv block 2: reflect-pad -> conv -> IN
    y = instance_norm(conv3x3(y, w2_ref, b2_ref))
    # residual add; lane-dense (HW multiple of 128) unmasked store.
    o_ref[0] = (x + y).astype(o_ref.dtype)


@jax.jit
def residual_block(x_nchw, w1_oihw, b1, w2_oihw, b2):
    """x_nchw: (N, C, H, W); conv weights in torch OIHW layout; biases (C,)."""
    N, C, H, W = x_nchw.shape
    assert H >= 2 and W >= 2, "ReflectionPad2d(1) requires H, W >= 2"
    HW = H * W

    x = x_nchw.reshape(N, C, HW)                          # lane-dense flat spatial
    # torch (Cout, Cin, kh, kw) -> (kh*3+kw, Cout, Cin)
    w1 = jnp.transpose(w1_oihw, (2, 3, 0, 1)).reshape(9, C, C)
    w2 = jnp.transpose(w2_oihw, (2, 3, 0, 1)).reshape(9, C, C)
    b1r = b1.reshape(C, 1)
    b2r = b2.reshape(C, 1)

    kernel = functools.partial(residual_block_kernel, H=H, W=W)

    itemsize = 4
    cost = pl.CostEstimate(
        flops=2 * 2 * 9 * C * C * HW * N,        # two 3x3 convs, 2 flops / MAC
        transcendentals=2 * C * N,               # per-channel rsqrt in each IN
        bytes_accessed=(2 * N * C * HW + 2 * 9 * C * C + 2 * C) * itemsize,
    )

    out = pl.pallas_call(
        kernel,
        out_shape=jax.ShapeDtypeStruct((N, C, HW), x.dtype),
        grid_spec=pltpu.PrefetchScalarGridSpec(
            num_scalar_prefetch=0,
            grid=(N,),
            in_specs=[
                pl.BlockSpec((1, C, HW), lambda n: (n, 0, 0)),
                pl.BlockSpec((9, C, C), lambda n: (0, 0, 0)),
                pl.BlockSpec((C, 1), lambda n: (0, 0)),
                pl.BlockSpec((9, C, C), lambda n: (0, 0, 0)),
                pl.BlockSpec((C, 1), lambda n: (0, 0)),
            ],
            out_specs=pl.BlockSpec((1, C, HW), lambda n: (n, 0, 0)),
        ),
        compiler_params=pltpu.CompilerParams(
            dimension_semantics=("parallel",),
            vmem_limit_bytes=32 * 1024 * 1024,
        ),
        cost_estimate=cost,
    )(x, w1, b1r, w2, b2r)

    return out.reshape(N, C, H, W)


def residual_block_reference(x, w1, b1, w2, b2):
    """Pure-JAX reference (NCHW, torch semantics) for validation."""
    def reflect_pad(a):
        return jnp.pad(a, ((0, 0), (0, 0), (1, 1), (1, 1)), mode="reflect")

    def conv(a, w, b):
        y = jax.lax.conv_general_dilated(
            a, w, window_strides=(1, 1), padding="VALID",
            dimension_numbers=("NCHW", "OIHW", "NCHW"))
        return y + b[None, :, None, None]

    def inorm(y):
        m = jnp.mean(y, axis=(2, 3), keepdims=True)
        v = jnp.mean((y - m) ** 2, axis=(2, 3), keepdims=True)
        return (y - m) / jnp.sqrt(v + EPS)

    y = jnp.maximum(inorm(conv(reflect_pad(x), w1, b1)), 0.0)
    y = inorm(conv(reflect_pad(y), w2, b2))
    return x + y


if __name__ == "__main__":
    # Small shapes consistent with the module: batch=2, in_features=4, 16x16 spatial.
    N, C, H, W = 2, 4, 16, 16

    key = jax.random.PRNGKey(0)
    kx, kw1, kb1, kw2, kb2 = jax.random.split(key, 5)

    x = jax.random.normal(kx, (N, C, H, W), dtype=jnp.float32)
    # Deterministic synthetic parameters (Conv2d(in_features, in_features, 3) shapes).
    w1 = jax.random.normal(kw1, (C, C, 3, 3), dtype=jnp.float32) * 0.1
    b1 = jax.random.normal(kb1, (C,), dtype=jnp.float32) * 0.1
    w2 = jax.random.normal(kw2, (C, C, 3, 3), dtype=jnp.float32) * 0.1
    b2 = jax.random.normal(kb2, (C,), dtype=jnp.float32) * 0.1

    out = jax.block_until_ready(residual_block(x, w1, b1, w2, b2))
    ref = jax.block_until_ready(residual_block_reference(x, w1, b1, w2, b2))

    assert out.shape == (N, C, H, W), out.shape
    assert jnp.allclose(out, ref, atol=1e-4, rtol=1e-4), (
        float(jnp.max(jnp.abs(out - ref))))

    print("KERNEL_OK")
</pallas_src>

<mosaic_0001>
module attributes {stable_mosaic.version = 11 : i64} {
  func.func @residual_block_kernel(%arg0: i32, %arg1: memref<1x4x256xf32, #tpu.memory_space<vmem>>, %arg2: memref<9x4x4xf32, #tpu.memory_space<vmem>>, %arg3: memref<4x1xf32, #tpu.memory_space<vmem>>, %arg4: memref<9x4x4xf32, #tpu.memory_space<vmem>>, %arg5: memref<4x1xf32, #tpu.memory_space<vmem>>, %arg6: memref<1x4x256xf32, #tpu.memory_space<vmem>>) attributes {dimension_semantics = [#tpu.dimension_semantics<parallel>], iteration_bounds = array<i64: 2>, scalar_prefetch = 0 : i64, scratch_operands = 0 : i64, tpu.core_type = #tpu.core_type<tc>, window_params = [{transform_indices = @transform_0, window_bounds = array<i64: 1, 4, 256>}, {pipeline_mode = #tpu.pipeline_mode<synchronous>, transform_indices = @transform_1, window_bounds = array<i64: 9, 4, 4>}, {pipeline_mode = #tpu.pipeline_mode<synchronous>, transform_indices = @transform_2, window_bounds = array<i64: 4, 1>}, {pipeline_mode = #tpu.pipeline_mode<synchronous>, transform_indices = @transform_3, window_bounds = array<i64: 9, 4, 4>}, {pipeline_mode = #tpu.pipeline_mode<synchronous>, transform_indices = @transform_4, window_bounds = array<i64: 4, 1>}, {transform_indices = @transform_5, window_bounds = array<i64: 1, 4, 256>}]} {
    %c0 = arith.constant 0 : index
    %c0_0 = arith.constant 0 : index
    %c0_1 = arith.constant 0 : index
    %0 = vector.load %arg1[%c0, %c0_0, %c0_1] : memref<1x4x256xf32, #tpu.memory_space<vmem>>, vector<1x4x256xf32>
    %1 = vector.shape_cast %0 : vector<1x4x256xf32> to vector<4x256xf32>
    %2 = tpu.iota {dimensions = array<i32: 1>} : vector<4x256xi32>
    %c16_i32 = arith.constant 16 : i32
    %c0_i32 = arith.constant 0 : i32
    %3 = arith.cmpi eq, %c16_i32, %c0_i32 : i32
    %c1_i32 = arith.constant 1 : i32
    %4 = arith.select %3, %c1_i32, %c16_i32 : i32
    %5 = vector.broadcast %4 : i32 to vector<4x256xi32>
    %6 = arith.remsi %2, %5 : vector<4x256xi32>
    %c0_i32_2 = arith.constant 0 : i32
    %7 = vector.broadcast %c0_i32_2 : i32 to vector<4x256xi32>
    %8 = arith.cmpi ne, %6, %7 : vector<4x256xi32>
    %c0_i32_3 = arith.constant 0 : i32
    %9 = vector.broadcast %c0_i32_3 : i32 to vector<4x256xi32>
    %10 = arith.cmpi slt, %6, %9 : vector<4x256xi32>
    %c0_i32_4 = arith.constant 0 : i32
    %11 = arith.cmpi slt, %4, %c0_i32_4 : i32
    %12 = vector.broadcast %11 : i1 to vector<4x256xi1>
    %13 = vector.broadcast %12 : vector<4x256xi1> to vector<4x256xi1>
    %14 = arith.xori %10, %13 : vector<4x256xi1>
    %15 = arith.andi %14, %8 : vector<4x256xi1>
    %16 = vector.broadcast %4 : i32 to vector<4x256xi32>
    %17 = arith.addi %6, %16 : vector<4x256xi32>
    %18 = arith.select %15, %17, %6 : vector<4x256xi1>, vector<4x256xi32>
    %c16_i32_5 = arith.constant 16 : i32
    %19 = vector.broadcast %c16_i32_5 : i32 to vector<4x256xi32>
    %20 = arith.cmpi slt, %2, %19 : vector<4x256xi32>
    %c240_i32 = arith.constant 240 : i32
    %21 = vector.broadcast %c240_i32 : i32 to vector<4x256xi32>
    %22 = arith.cmpi sge, %2, %21 : vector<4x256xi32>
    %c0_i32_6 = arith.constant 0 : i32
    %23 = vector.broadcast %c0_i32_6 : i32 to vector<4x256xi32>
    %24 = arith.cmpi eq, %18, %23 : vector<4x256xi32>
    %c15_i32 = arith.constant 15 : i32
    %25 = vector.broadcast %c15_i32 : i32 to vector<4x256xi32>
    %26 = arith.cmpi eq, %18, %25 : vector<4x256xi32>
    %27 = vector.extract_strided_slice %1 {offsets = [0, 240], sizes = [4, 16], strides = [1, 1]} : vector<4x256xf32> to vector<4x16xf32>
    %28 = vector.extract_strided_slice %1 {offsets = [0, 0], sizes = [4, 240], strides = [1, 1]} : vector<4x256xf32> to vector<4x240xf32>
    %29 = tpu.concatenate %27, %28 in 1 : vector<4x16xf32>, vector<4x240xf32> -> vector<4x256xf32>
    %30 = vector.extract_strided_slice %1 {offsets = [0, 16], sizes = [4, 240], strides = [1, 1]} : vector<4x256xf32> to vector<4x240xf32>
    %31 = vector.extract_strided_slice %1 {offsets = [0, 0], sizes = [4, 16], strides = [1, 1]} : vector<4x256xf32> to vector<4x16xf32>
    %32 = tpu.concatenate %30, %31 in 1 : vector<4x240xf32>, vector<4x16xf32> -> vector<4x256xf32>
    %33 = arith.select %20, %32, %29 : vector<4x256xi1>, vector<4x256xf32>
    %34 = arith.select %22, %29, %32 : vector<4x256xi1>, vector<4x256xf32>
    %35 = vector.extract_strided_slice %33 {offsets = [0, 255], sizes = [4, 1], strides = [1, 1]} : vector<4x256xf32> to vector<4x1xf32>
    %36 = vector.extract_strided_slice %33 {offsets = [0, 0], sizes = [4, 255], strides = [1, 1]} : vector<4x256xf32> to vector<4x255xf32>
    %37 = tpu.concatenate %35, %36 in 1 : vector<4x1xf32>, vector<4x255xf32> -> vector<4x256xf32>
    %38 = vector.extract_strided_slice %33 {offsets = [0, 1], sizes = [4, 255], strides = [1, 1]} : vector<4x256xf32> to vector<4x255xf32>
    %39 = vector.extract_strided_slice %33 {offsets = [0, 0], sizes = [4, 1], strides = [1, 1]} : vector<4x256xf32> to vector<4x1xf32>
    %40 = tpu.concatenate %38, %39 in 1 : vector<4x255xf32>, vector<4x1xf32> -> vector<4x256xf32>
    %41 = arith.select %24, %40, %37 : vector<4x256xi1>, vector<4x256xf32>
    %42 = arith.select %26, %37, %40 : vector<4x256xi1>, vector<4x256xf32>
    %43 = vector.extract_strided_slice %1 {offsets = [0, 255], sizes = [4, 1], strides = [1, 1]} : vector<4x256xf32> to vector<4x1xf32>
    %44 = vector.extract_strided_slice %1 {offsets = [0, 0], sizes = [4, 255], strides = [1, 1]} : vector<4x256xf32> to vector<4x255xf32>
    %45 = tpu.concatenate %43, %44 in 1 : vector<4x1xf32>, vector<4x255xf32> -> vector<4x256xf32>
    %46 = vector.extract_strided_slice %1 {offsets = [0, 1], sizes = [4, 255], strides = [1, 1]} : vector<4x256xf32> to vector<4x255xf32>
    %47 = vector.extract_strided_slice %1 {offsets = [0, 0], sizes = [4, 1], strides = [1, 1]} : vector<4x256xf32> to vector<4x1xf32>
    %48 = tpu.concatenate %46, %47 in 1 : vector<4x255xf32>, vector<4x1xf32> -> vector<4x256xf32>
    %49 = arith.select %24, %48, %45 : vector<4x256xi1>, vector<4x256xf32>
    %50 = arith.select %26, %45, %48 : vector<4x256xi1>, vector<4x256xf32>
    %51 = vector.extract_strided_slice %34 {offsets = [0, 255], sizes = [4, 1], strides = [1, 1]} : vector<4x256xf32> to vector<4x1xf32>
    %52 = vector.extract_strided_slice %34 {offsets = [0, 0], sizes = [4, 255], strides = [1, 1]} : vector<4x256xf32> to vector<4x255xf32>
    %53 = tpu.concatenate %51, %52 in 1 : vector<4x1xf32>, vector<4x255xf32> -> vector<4x256xf32>
    %54 = vector.extract_strided_slice %34 {offsets = [0, 1], sizes = [4, 255], strides = [1, 1]} : vector<4x256xf32> to vector<4x255xf32>
    %55 = vector.extract_strided_slice %34 {offsets = [0, 0], sizes = [4, 1], strides = [1, 1]} : vector<4x256xf32> to vector<4x1xf32>
    %56 = tpu.concatenate %54, %55 in 1 : vector<4x255xf32>, vector<4x1xf32> -> vector<4x256xf32>
    %57 = arith.select %24, %56, %53 : vector<4x256xi1>, vector<4x256xf32>
    %58 = arith.select %26, %53, %56 : vector<4x256xi1>, vector<4x256xf32>
    %cst = arith.constant 0.000000e+00 : f32
    %59 = vector.broadcast %cst : f32 to vector<4x256xf32>
    %c0_7 = arith.constant 0 : index
    %c0_8 = arith.constant 0 : index
    %c0_9 = arith.constant 0 : index
    %60 = vector.load %arg2[%c0_7, %c0_8, %c0_9] : memref<9x4x4xf32, #tpu.memory_space<vmem>>, vector<1x4x4xf32>
    %61 = vector.shape_cast %60 : vector<1x4x4xf32> to vector<4x4xf32>
    %cst_10 = arith.constant dense<0.000000e+00> : vector<4x256xf32>
    %62 = tpu.matmul %61, %41, %cst_10 {dimension_numbers = #tpu.dot_dimension_numbers<[1], [0], [0], [1], [0, 0, 1, 1], [], []>} : vector<4x4xf32>, vector<4x256xf32>, vector<4x256xf32> -> vector<4x256xf32>
    %63 = arith.addf %59, %62 : vector<4x256xf32>
    %c1 = arith.constant 1 : index
    %c0_11 = arith.constant 0 : index
    %c0_12 = arith.constant 0 : index
    %64 = vector.load %arg2[%c1, %c0_11, %c0_12] : memref<9x4x4xf32, #tpu.memory_space<vmem>>, vector<1x4x4xf32>
    %65 = vector.shape_cast %64 : vector<1x4x4xf32> to vector<4x4xf32>
    %cst_13 = arith.constant dense<0.000000e+00> : vector<4x256xf32>
    %66 = tpu.matmul %65, %33, %cst_13 {dimension_numbers = #tpu.dot_dimension_numbers<[1], [0], [0], [1], [0, 0, 1, 1], [], []>} : vector<4x4xf32>, vector<4x256xf32>, vector<4x256xf32> -> vector<4x256xf32>
    %67 = arith.addf %63, %66 : vector<4x256xf32>
    %c2 = arith.constant 2 : index
    %c0_14 = arith.constant 0 : index
    %c0_15 = arith.constant 0 : index
    %68 = vector.load %arg2[%c2, %c0_14, %c0_15] : memref<9x4x4xf32, #tpu.memory_space<vmem>>, vector<1x4x4xf32>
    %69 = vector.shape_cast %68 : vector<1x4x4xf32> to vector<4x4xf32>
    %cst_16 = arith.constant dense<0.000000e+00> : vector<4x256xf32>
    %70 = tpu.matmul %69, %42, %cst_16 {dimension_numbers = #tpu.dot_dimension_numbers<[1], [0], [0], [1], [0, 0, 1, 1], [], []>} : vector<4x4xf32>, vector<4x256xf32>, vector<4x256xf32> -> vector<4x256xf32>
    %71 = arith.addf %67, %70 : vector<4x256xf32>
    %c3 = arith.constant 3 : index
    %c0_17 = arith.constant 0 : index
    %c0_18 = arith.constant 0 : index
    %72 = vector.load %arg2[%c3, %c0_17, %c0_18] : memref<9x4x4xf32, #tpu.memory_space<vmem>>, vector<1x4x4xf32>
    %73 = vector.shape_cast %72 : vector<1x4x4xf32> to vector<4x4xf32>
    %cst_19 = arith.constant dense<0.000000e+00> : vector<4x256xf32>
    %74 = tpu.matmul %73, %49, %cst_19 {dimension_numbers = #tpu.dot_dimension_numbers<[1], [0], [0], [1], [0, 0, 1, 1], [], []>} : vector<4x4xf32>, vector<4x256xf32>, vector<4x256xf32> -> vector<4x256xf32>
    %75 = arith.addf %71, %74 : vector<4x256xf32>
    %c4 = arith.constant 4 : index
    %c0_20 = arith.constant 0 : index
    %c0_21 = arith.constant 0 : index
    %76 = vector.load %arg2[%c4, %c0_20, %c0_21] : memref<9x4x4xf32, #tpu.memory_space<vmem>>, vector<1x4x4xf32>
    %77 = vector.shape_cast %76 : vector<1x4x4xf32> to vector<4x4xf32>
    %cst_22 = arith.constant dense<0.000000e+00> : vector<4x256xf32>
    %78 = tpu.matmul %77, %1, %cst_22 {dimension_numbers = #tpu.dot_dimension_numbers<[1], [0], [0], [1], [0, 0, 1, 1], [], []>} : vector<4x4xf32>, vector<4x256xf32>, vector<4x256xf32> -> vector<4x256xf32>
    %79 = arith.addf %75, %78 : vector<4x256xf32>
    %c5 = arith.constant 5 : index
    %c0_23 = arith.constant 0 : index
    %c0_24 = arith.constant 0 : index
    %80 = vector.load %arg2[%c5, %c0_23, %c0_24] : memref<9x4x4xf32, #tpu.memory_space<vmem>>, vector<1x4x4xf32>
    %81 = vector.shape_cast %80 : vector<1x4x4xf32> to vector<4x4xf32>
    %cst_25 = arith.constant dense<0.000000e+00> : vector<4x256xf32>
    %82 = tpu.matmul %81, %50, %cst_25 {dimension_numbers = #tpu.dot_dimension_numbers<[1], [0], [0], [1], [0, 0, 1, 1], [], []>} : vector<4x4xf32>, vector<4x256xf32>, vector<4x256xf32> -> vector<4x256xf32>
    %83 = arith.addf %79, %82 : vector<4x256xf32>
    %c6 = arith.constant 6 : index
    %c0_26 = arith.constant 0 : index
    %c0_27 = arith.constant 0 : index
    %84 = vector.load %arg2[%c6, %c0_26, %c0_27] : memref<9x4x4xf32, #tpu.memory_space<vmem>>, vector<1x4x4xf32>
    %85 = vector.shape_cast %84 : vector<1x4x4xf32> to vector<4x4xf32>
    %cst_28 = arith.constant dense<0.000000e+00> : vector<4x256xf32>
    %86 = tpu.matmul %85, %57, %cst_28 {dimension_numbers = #tpu.dot_dimension_numbers<[1], [0], [0], [1], [0, 0, 1, 1], [], []>} : vector<4x4xf32>, vector<4x256xf32>, vector<4x256xf32> -> vector<4x256xf32>
    %87 = arith.addf %83, %86 : vector<4x256xf32>
    %c7 = arith.constant 7 : index
    %c0_29 = arith.constant 0 : index
    %c0_30 = arith.constant 0 : index
    %88 = vector.load %arg2[%c7, %c0_29, %c0_30] : memref<9x4x4xf32, #tpu.memory_space<vmem>>, vector<1x4x4xf32>
    %89 = vector.shape_cast %88 : vector<1x4x4xf32> to vector<4x4xf32>
    %cst_31 = arith.constant dense<0.000000e+00> : vector<4x256xf32>
    %90 = tpu.matmul %89, %34, %cst_31 {dimension_numbers = #tpu.dot_dimension_numbers<[1], [0], [0], [1], [0, 0, 1, 1], [], []>} : vector<4x4xf32>, vector<4x256xf32>, vector<4x256xf32> -> vector<4x256xf32>
    %91 = arith.addf %87, %90 : vector<4x256xf32>
    %c8 = arith.constant 8 : index
    %c0_32 = arith.constant 0 : index
    %c0_33 = arith.constant 0 : index
    %92 = vector.load %arg2[%c8, %c0_32, %c0_33] : memref<9x4x4xf32, #tpu.memory_space<vmem>>, vector<1x4x4xf32>
    %93 = vector.shape_cast %92 : vector<1x4x4xf32> to vector<4x4xf32>
    %cst_34 = arith.constant dense<0.000000e+00> : vector<4x256xf32>
    %94 = tpu.matmul %93, %58, %cst_34 {dimension_numbers = #tpu.dot_dimension_numbers<[1], [0], [0], [1], [0, 0, 1, 1], [], []>} : vector<4x4xf32>, vector<4x256xf32>, vector<4x256xf32> -> vector<4x256xf32>
    %95 = arith.addf %91, %94 : vector<4x256xf32>
    %c0_35 = arith.constant 0 : index
    %c0_36 = arith.constant 0 : index
    %96 = vector.load %arg3[%c0_35, %c0_36] : memref<4x1xf32, #tpu.memory_space<vmem>>, vector<4x1xf32>
    %97 = vector.broadcast %96 : vector<4x1xf32> to vector<4x256xf32>
    %98 = arith.addf %95, %97 : vector<4x256xf32>
    %cst_37 = arith.constant dense<0.000000e+00> : vector<4xf32>
    %99 = vector.multi_reduction <add>, %98, %cst_37 [1] : vector<4x256xf32> to vector<4xf32>
    %100 = vector.shape_cast %99 : vector<4xf32> to vector<4x1xf32>
    %101 = arith.mulf %98, %98 : vector<4x256xf32>
    %cst_38 = arith.constant dense<0.000000e+00> : vector<4xf32>
    %102 = vector.multi_reduction <add>, %101, %cst_38 [1] : vector<4x256xf32> to vector<4xf32>
    %103 = vector.shape_cast %102 : vector<4xf32> to vector<4x1xf32>
    %cst_39 = arith.constant 3.906250e-03 : f32
    %104 = vector.broadcast %cst_39 : f32 to vector<4x1xf32>
    %105 = arith.mulf %100, %104 : vector<4x1xf32>
    %cst_40 = arith.constant 3.906250e-03 : f32
    %106 = vector.broadcast %cst_40 : f32 to vector<4x1xf32>
    %107 = arith.mulf %103, %106 : vector<4x1xf32>
    %108 = arith.mulf %105, %105 : vector<4x1xf32>
    %109 = arith.subf %107, %108 : vector<4x1xf32>
    %cst_41 = arith.constant 0.000000e+00 : f32
    %110 = vector.broadcast %cst_41 : f32 to vector<4x1xf32>
    %111 = arith.maximumf %109, %110 : vector<4x1xf32>
    %112 = vector.broadcast %105 : vector<4x1xf32> to vector<4x256xf32>
    %113 = arith.subf %98, %112 : vector<4x256xf32>
    %cst_42 = arith.constant 9.99999974E-6 : f32
    %114 = vector.broadcast %cst_42 : f32 to vector<4x1xf32>
    %115 = arith.addf %111, %114 : vector<4x1xf32>
    %116 = math.rsqrt %115 : vector<4x1xf32>
    %117 = vector.broadcast %116 : vector<4x1xf32> to vector<4x256xf32>
    %118 = arith.mulf %113, %117 : vector<4x256xf32>
    %cst_43 = arith.constant 0.000000e+00 : f32
    %119 = vector.broadcast %cst_43 : f32 to vector<4x256xf32>
    %120 = arith.maximumf %118, %119 : vector<4x256xf32>
    %121 = vector.extract_strided_slice %120 {offsets = [0, 240], sizes = [4, 16], strides = [1, 1]} : vector<4x256xf32> to vector<4x16xf32>
    %122 = vector.extract_strided_slice %120 {offsets = [0, 0], sizes = [4, 240], strides = [1, 1]} : vector<4x256xf32> to vector<4x240xf32>
    %123 = tpu.concatenate %121, %122 in 1 : vector<4x16xf32>, vector<4x240xf32> -> vector<4x256xf32>
    %124 = vector.extract_strided_slice %120 {offsets = [0, 16], sizes = [4, 240], strides = [1, 1]} : vector<4x256xf32> to vector<4x240xf32>
    %125 = vector.extract_strided_slice %120 {offsets = [0, 0], sizes = [4, 16], strides = [1, 1]} : vector<4x256xf32> to vector<4x16xf32>
    %126 = tpu.concatenate %124, %125 in 1 : vector<4x240xf32>, vector<4x16xf32> -> vector<4x256xf32>
    %127 = arith.select %20, %126, %123 : vector<4x256xi1>, vector<4x256xf32>
    %128 = arith.select %22, %123, %126 : vector<4x256xi1>, vector<4x256xf32>
    %129 = vector.extract_strided_slice %127 {offsets = [0, 255], sizes = [4, 1], strides = [1, 1]} : vector<4x256xf32> to vector<4x1xf32>
    %130 = vector.extract_strided_slice %127 {offsets = [0, 0], sizes = [4, 255], strides = [1, 1]} : vector<4x256xf32> to vector<4x255xf32>
    %131 = tpu.concatenate %129, %130 in 1 : vector<4x1xf32>, vector<4x255xf32> -> vector<4x256xf32>
    %132 = vector.extract_strided_slice %127 {offsets = [0, 1], sizes = [4, 255], strides = [1, 1]} : vector<4x256xf32> to vector<4x255xf32>
    %133 = vector.extract_strided_slice %127 {offsets = [0, 0], sizes = [4, 1], strides = [1, 1]} : vector<4x256xf32> to vector<4x1xf32>
    %134 = tpu.concatenate %132, %133 in 1 : vector<4x255xf32>, vector<4x1xf32> -> vector<4x256xf32>
    %135 = arith.select %24, %134, %131 : vector<4x256xi1>, vector<4x256xf32>
    %136 = arith.select %26, %131, %134 : vector<4x256xi1>, vector<4x256xf32>
    %137 = vector.extract_strided_slice %120 {offsets = [0, 255], sizes = [4, 1], strides = [1, 1]} : vector<4x256xf32> to vector<4x1xf32>
    %138 = vector.extract_strided_slice %120 {offsets = [0, 0], sizes = [4, 255], strides = [1, 1]} : vector<4x256xf32> to vector<4x255xf32>
    %139 = tpu.concatenate %137, %138 in 1 : vector<4x1xf32>, vector<4x255xf32> -> vector<4x256xf32>
    %140 = vector.extract_strided_slice %120 {offsets = [0, 1], sizes = [4, 255], strides = [1, 1]} : vector<4x256xf32> to vector<4x255xf32>
    %141 = vector.extract_strided_slice %120 {offsets = [0, 0], sizes = [4, 1], strides = [1, 1]} : vector<4x256xf32> to vector<4x1xf32>
    %142 = tpu.concatenate %140, %141 in 1 : vector<4x255xf32>, vector<4x1xf32> -> vector<4x256xf32>
    %143 = arith.select %24, %142, %139 : vector<4x256xi1>, vector<4x256xf32>
    %144 = arith.select %26, %139, %142 : vector<4x256xi1>, vector<4x256xf32>
    %145 = vector.extract_strided_slice %128 {offsets = [0, 255], sizes = [4, 1], strides = [1, 1]} : vector<4x256xf32> to vector<4x1xf32>
    %146 = vector.extract_strided_slice %128 {offsets = [0, 0], sizes = [4, 255], strides = [1, 1]} : vector<4x256xf32> to vector<4x255xf32>
    %147 = tpu.concatenate %145, %146 in 1 : vector<4x1xf32>, vector<4x255xf32> -> vector<4x256xf32>
    %148 = vector.extract_strided_slice %128 {offsets = [0, 1], sizes = [4, 255], strides = [1, 1]} : vector<4x256xf32> to vector<4x255xf32>
    %149 = vector.extract_strided_slice %128 {offsets = [0, 0], sizes = [4, 1], strides = [1, 1]} : vector<4x256xf32> to vector<4x1xf32>
    %150 = tpu.concatenate %148, %149 in 1 : vector<4x255xf32>, vector<4x1xf32> -> vector<4x256xf32>
    %151 = arith.select %24, %150, %147 : vector<4x256xi1>, vector<4x256xf32>
    %152 = arith.select %26, %147, %150 : vector<4x256xi1>, vector<4x256xf32>
    %cst_44 = arith.constant 0.000000e+00 : f32
    %153 = vector.broadcast %cst_44 : f32 to vector<4x256xf32>
    %c0_45 = arith.constant 0 : index
    %c0_46 = arith.constant 0 : index
    %c0_47 = arith.constant 0 : index
    %154 = vector.load %arg4[%c0_45, %c0_46, %c0_47] : memref<9x4x4xf32, #tpu.memory_space<vmem>>, vector<1x4x4xf32>
    %155 = vector.shape_cast %154 : vector<1x4x4xf32> to vector<4x4xf32>
    %cst_48 = arith.constant dense<0.000000e+00> : vector<4x256xf32>
    %156 = tpu.matmul %155, %135, %cst_48 {dimension_numbers = #tpu.dot_dimension_numbers<[1], [0], [0], [1], [0, 0, 1, 1], [], []>} : vector<4x4xf32>, vector<4x256xf32>, vector<4x256xf32> -> vector<4x256xf32>
    %157 = arith.addf %153, %156 : vector<4x256xf32>
    %c1_49 = arith.constant 1 : index
    %c0_50 = arith.constant 0 : index
    %c0_51 = arith.constant 0 : index
    %158 = vector.load %arg4[%c1_49, %c0_50, %c0_51] : memref<9x4x4xf32, #tpu.memory_space<vmem>>, vector<1x4x4xf32>
    %159 = vector.shape_cast %158 : vector<1x4x4xf32> to vector<4x4xf32>
    %cst_52 = arith.constant dense<0.000000e+00> : vector<4x256xf32>
    %160 = tpu.matmul %159, %127, %cst_52 {dimension_numbers = #tpu.dot_dimension_numbers<[1], [0], [0], [1], [0, 0, 1, 1], [], []>} : vector<4x4xf32>, vector<4x256xf32>, vector<4x256xf32> -> vector<4x256xf32>
    %161 = arith.addf %157, %160 : vector<4x256xf32>
    %c2_53 = arith.constant 2 : index
    %c0_54 = arith.constant 0 : index
    %c0_55 = arith.constant 0 : index
    %162 = vector.load %arg4[%c2_53, %c0_54, %c0_55] : memref<9x4x4xf32, #tpu.memory_space<vmem>>, vector<1x4x4xf32>
    %163 = vector.shape_cast %162 : vector<1x4x4xf32> to vector<4x4xf32>
    %cst_56 = arith.constant dense<0.000000e+00> : vector<4x256xf32>
    %164 = tpu.matmul %163, %136, %cst_56 {dimension_numbers = #tpu.dot_dimension_numbers<[1], [0], [0], [1], [0, 0, 1, 1], [], []>} : vector<4x4xf32>, vector<4x256xf32>, vector<4x256xf32> -> vector<4x256xf32>
    %165 = arith.addf %161, %164 : vector<4x256xf32>
    %c3_57 = arith.constant 3 : index
    %c0_58 = arith.constant 0 : index
    %c0_59 = arith.constant 0 : index
    %166 = vector.load %arg4[%c3_57, %c0_58, %c0_59] : memref<9x4x4xf32, #tpu.memory_space<vmem>>, vector<1x4x4xf32>
    %167 = vector.shape_cast %166 : vector<1x4x4xf32> to vector<4x4xf32>
    %cst_60 = arith.constant dense<0.000000e+00> : vector<4x256xf32>
    %168 = tpu.matmul %167, %143, %cst_60 {dimension_numbers = #tpu.dot_dimension_numbers<[1], [0], [0], [1], [0, 0, 1, 1], [], []>} : vector<4x4xf32>, vector<4x256xf32>, vector<4x256xf32> -> vector<4x256xf32>
    %169 = arith.addf %165, %168 : vector<4x256xf32>
    %c4_61 = arith.constant 4 : index
    %c0_62 = arith.constant 0 : index
    %c0_63 = arith.constant 0 : index
    %170 = vector.load %arg4[%c4_61, %c0_62, %c0_63] : memref<9x4x4xf32, #tpu.memory_space<vmem>>, vector<1x4x4xf32>
    %171 = vector.shape_cast %170 : vector<1x4x4xf32> to vector<4x4xf32>
    %cst_64 = arith.constant dense<0.000000e+00> : vector<4x256xf32>
    %172 = tpu.matmul %171, %120, %cst_64 {dimension_numbers = #tpu.dot_dimension_numbers<[1], [0], [0], [1], [0, 0, 1, 1], [], []>} : vector<4x4xf32>, vector<4x256xf32>, vector<4x256xf32> -> vector<4x256xf32>
    %173 = arith.addf %169, %172 : vector<4x256xf32>
    %c5_65 = arith.constant 5 : index
    %c0_66 = arith.constant 0 : index
    %c0_67 = arith.constant 0 : index
    %174 = vector.load %arg4[%c5_65, %c0_66, %c0_67] : memref<9x4x4xf32, #tpu.memory_space<vmem>>, vector<1x4x4xf32>
    %175 = vector.shape_cast %174 : vector<1x4x4xf32> to vector<4x4xf32>
    %cst_68 = arith.constant dense<0.000000e+00> : vector<4x256xf32>
    %176 = tpu.matmul %175, %144, %cst_68 {dimension_numbers = #tpu.dot_dimension_numbers<[1], [0], [0], [1], [0, 0, 1, 1], [], []>} : vector<4x4xf32>, vector<4x256xf32>, vector<4x256xf32> -> vector<4x256xf32>
    %177 = arith.addf %173, %176 : vector<4x256xf32>
    %c6_69 = arith.constant 6 : index
    %c0_70 = arith.constant 0 : index
    %c0_71 = arith.constant 0 : index
    %178 = vector.load %arg4[%c6_69, %c0_70, %c0_71] : memref<9x4x4xf32, #tpu.memory_space<vmem>>, vector<1x4x4xf32>
    %179 = vector.shape_cast %178 : vector<1x4x4xf32> to vector<4x4xf32>
    %cst_72 = arith.constant dense<0.000000e+00> : vector<4x256xf32>
    %180 = tpu.matmul %179, %151, %cst_72 {dimension_numbers = #tpu.dot_dimension_numbers<[1], [0], [0], [1], [0, 0, 1, 1], [], []>} : vector<4x4xf32>, vector<4x256xf32>, vector<4x256xf32> -> vector<4x256xf32>
    %181 = arith.addf %177, %180 : vector<4x256xf32>
    %c7_73 = arith.constant 7 : index
    %c0_74 = arith.constant 0 : index
    %c0_75 = arith.constant 0 : index
    %182 = vector.load %arg4[%c7_73, %c0_74, %c0_75] : memref<9x4x4xf32, #tpu.memory_space<vmem>>, vector<1x4x4xf32>
    %183 = vector.shape_cast %182 : vector<1x4x4xf32> to vector<4x4xf32>
    %cst_76 = arith.constant dense<0.000000e+00> : vector<4x256xf32>
    %184 = tpu.matmul %183, %128, %cst_76 {dimension_numbers = #tpu.dot_dimension_numbers<[1], [0], [0], [1], [0, 0, 1, 1], [], []>} : vector<4x4xf32>, vector<4x256xf32>, vector<4x256xf32> -> vector<4x256xf32>
    %185 = arith.addf %181, %184 : vector<4x256xf32>
    %c8_77 = arith.constant 8 : index
    %c0_78 = arith.constant 0 : index
    %c0_79 = arith.constant 0 : index
    %186 = vector.load %arg4[%c8_77, %c0_78, %c0_79] : memref<9x4x4xf32, #tpu.memory_space<vmem>>, vector<1x4x4xf32>
    %187 = vector.shape_cast %186 : vector<1x4x4xf32> to vector<4x4xf32>
    %cst_80 = arith.constant dense<0.000000e+00> : vector<4x256xf32>
    %188 = tpu.matmul %187, %152, %cst_80 {dimension_numbers = #tpu.dot_dimension_numbers<[1], [0], [0], [1], [0, 0, 1, 1], [], []>} : vector<4x4xf32>, vector<4x256xf32>, vector<4x256xf32> -> vector<4x256xf32>
    %189 = arith.addf %185, %188 : vector<4x256xf32>
    %c0_81 = arith.constant 0 : index
    %c0_82 = arith.constant 0 : index
    %190 = vector.load %arg5[%c0_81, %c0_82] : memref<4x1xf32, #tpu.memory_space<vmem>>, vector<4x1xf32>
    %191 = vector.broadcast %190 : vector<4x1xf32> to vector<4x256xf32>
    %192 = arith.addf %189, %191 : vector<4x256xf32>
    %cst_83 = arith.constant dense<0.000000e+00> : vector<4xf32>
    %193 = vector.multi_reduction <add>, %192, %cst_83 [1] : vector<4x256xf32> to vector<4xf32>
    %194 = vector.shape_cast %193 : vector<4xf32> to vector<4x1xf32>
    %195 = arith.mulf %192, %192 : vector<4x256xf32>
    %cst_84 = arith.constant dense<0.000000e+00> : vector<4xf32>
    %196 = vector.multi_reduction <add>, %195, %cst_84 [1] : vector<4x256xf32> to vector<4xf32>
    %197 = vector.shape_cast %196 : vector<4xf32> to vector<4x1xf32>
    %cst_85 = arith.constant 3.906250e-03 : f32
    %198 = vector.broadcast %cst_85 : f32 to vector<4x1xf32>
    %199 = arith.mulf %194, %198 : vector<4x1xf32>
    %cst_86 = arith.constant 3.906250e-03 : f32
    %200 = vector.broadcast %cst_86 : f32 to vector<4x1xf32>
    %201 = arith.mulf %197, %200 : vector<4x1xf32>
    %202 = arith.mulf %199, %199 : vector<4x1xf32>
    %203 = arith.subf %201, %202 : vector<4x1xf32>
    %cst_87 = arith.constant 0.000000e+00 : f32
    %204 = vector.broadcast %cst_87 : f32 to vector<4x1xf32>
    %205 = arith.maximumf %203, %204 : vector<4x1xf32>
    %206 = vector.broadcast %199 : vector<4x1xf32> to vector<4x256xf32>
    %207 = arith.subf %192, %206 : vector<4x256xf32>
    %cst_88 = arith.constant 9.99999974E-6 : f32
    %208 = vector.broadcast %cst_88 : f32 to vector<4x1xf32>
    %209 = arith.addf %205, %208 : vector<4x1xf32>
    %210 = math.rsqrt %209 : vector<4x1xf32>
    %211 = vector.broadcast %210 : vector<4x1xf32> to vector<4x256xf32>
    %212 = arith.mulf %207, %211 : vector<4x256xf32>
    %213 = arith.addf %1, %212 : vector<4x256xf32>
    %c0_89 = arith.constant 0 : index
    %c0_90 = arith.constant 0 : index
    %c0_91 = arith.constant 0 : index
    %214 = vector.load %arg6[%c0_89, %c0_90, %c0_91] : memref<1x4x256xf32, #tpu.memory_space<vmem>>, vector<1x4x256xf32>
    %215 = vector.shape_cast %214 : vector<1x4x256xf32> to vector<4x256xf32>
    %216 = vector.shape_cast %213 : vector<4x256xf32> to vector<1x4x256xf32>
    tpu.vector_store %arg6[%c0_89, %c0_90, %c0_91], %216 {strides = array<i32>} : memref<1x4x256xf32, #tpu.memory_space<vmem>>, vector<1x4x256xf32>,
    return
  }
  func.func @transform_0(%arg0: i32) -> (i32, i32, i32) {
    %c0_i32 = arith.constant 0 : i32
    %c0_i32_0 = arith.constant 0 : i32
    %c0_i32_1 = arith.constant 0 : i32
    return %arg0, %c0_i32, %c0_i32_0 : i32, i32, i32
  }
  func.func @transform_1(%arg0: i32) -> (i32, i32, i32) {
    %c0_i32 = arith.constant 0 : i32
    %c0_i32_0 = arith.constant 0 : i32
    %c0_i32_1 = arith.constant 0 : i32
    %c0_i32_2 = arith.constant 0 : i32
    return %c0_i32, %c0_i32_0, %c0_i32_1 : i32, i32, i32
  }
  func.func @transform_2(%arg0: i32) -> (i32, i32) {
    %c0_i32 = arith.constant 0 : i32
    %c0_i32_0 = arith.constant 0 : i32
    %c0_i32_1 = arith.constant 0 : i32
    return %c0_i32, %c0_i32_0 : i32, i32
  }
  func.func @transform_3(%arg0: i32) -> (i32, i32, i32) {
    %c0_i32 = arith.constant 0 : i32
    %c0_i32_0 = arith.constant 0 : i32
    %c0_i32_1 = arith.constant 0 : i32
    %c0_i32_2 = arith.constant 0 : i32
    return %c0_i32, %c0_i32_0, %c0_i32_1 : i32, i32, i32
  }
  func.func @transform_4(%arg0: i32) -> (i32, i32) {
    %c0_i32 = arith.constant 0 : i32
    %c0_i32_0 = arith.constant 0 : i32
    %c0_i32_1 = arith.constant 0 : i32
    return %c0_i32, %c0_i32_0 : i32, i32
  }
  func.func @transform_5(%arg0: i32) -> (i32, i32, i32) {
    %c0_i32 = arith.constant 0 : i32
    %c0_i32_0 = arith.constant 0 : i32
    %c0_i32_1 = arith.constant 0 : i32
    return %arg0, %c0_i32, %c0_i32_0 : i32, i32, i32
  }
}

</mosaic_0001>

<llo_original>
// kernel: residual_block.1
$region0: #{residual_block.1}
  #allocation0 [shape = 'u32[]', space=smem, size = 0x4, offset = 0x4, fixed_abs, tag = 'smem constant byte address 0x4 - core index']
  #allocation1 [shape = 'u32[72,128]{1,0:T(1,128)}', space=vmem, size = 0x9000, scoped, tag = 'internal scratch']
  %s0 = inlined_call_operand.vmem [shape: f32[2,4,256], index: 0, kind: input, shape index: {}]
  %s1 = inlined_call_operand.vmem [shape: f32[9,4,4], index: 1, kind: input, shape index: {}]
  %s2 = inlined_call_operand.vmem [shape: f32[4,1], index: 2, kind: input, shape index: {}]
  %s3 = inlined_call_operand.vmem [shape: f32[9,4,4], index: 3, kind: input, shape index: {}]
  %s4 = inlined_call_operand.vmem [shape: f32[4,1], index: 4, kind: input, shape index: {}]
  %s5 = inlined_call_operand.vmem [shape: f32[2,4,256], index: 5, kind: output, shape index: {}]
  %s6 = sld [smem:[#allocation0]]
  $region53: #{residual_block.1} parent=0
    _
  %s8 = ssub.s32 1, %s6
  %s9 = scalar_select 0, %s8, %s6
  loop: start=0, step=1, limit=4
  $region2: #{residual_block.1} parent=0 // loop_pre_header
    _
  $region3: #{residual_block.1} parent=0 // loop_header
    %s11 = sphi 0, %s15
    %p12 = scmp.ge.s32.totalorder %s11, 4
    %s21 = sphi 0, %s23
    %s24 = sphi 0, %s21
    %s25 = sphi 0, %s24
    %s41 = sphi 0, %s25
    %s45 = sphi 0, %s45
    %s47 = sphi 0, %s45
    %s48 = sphi 0, %s47
    %s62 = sphi 0, %s48
    %s66 = sphi 0, %s66
    %s68 = sphi 0, %s66
    %s69 = sphi 0, %s68
    %s83 = sphi 0, %s69
    %s87 = sphi 0, %s87
    %s89 = sphi 0, %s87
    %s90 = sphi 0, %s89
    %s104 = sphi 0, %s90
    %s108 = sphi 0, %s108
    %s110 = sphi 0, %s108
    %s111 = sphi 0, %s110
    %s125 = sphi 0, %s111
    %s131 = sphi 0, %s133
    %s134 = sphi 0, %s131
    %s135 = sphi 0, %s134
    %s151 = sphi 0, %s135
  $region4: #{residual_block.1} parent=0 // loop_header_branch
    %14 = sbr.rel (%p12) target = $region8
  $region5: #{residual_block.1} parent=0 // loop_body
    %s16 = ssub.s32 %s11, 1
    %s17 = ssub.s32 %s11, 2
    %s18 = sadd.s32 %s11, 1
    %s19 = ssub.s32 %s11, %s18
    %p20 = scmp.eq.s32.totalorder %s19, 0
    %s22 = sadd.s32 %s21, 1
    %s23 = scalar_select %p20, %s21, %s22
    %p26 = pneg %p20
    %p27 = scmp.eq.s32.totalorder %s11, 1
    %p28 = por %p26, %p27
    %p29 = scmp.ne.s32.totalorder %s21, %s24
    %p30 = scmp.eq.s32.totalorder %s11, 0
    %p31 = por %p29, %p30
    %p32 = scmp.ne.s32.totalorder %s21, %s24
    %p33 = scmp.eq.s32.totalorder %s16, 1
    %p34 = por %p32, %p33
    %p35 = scmp.ne.s32.totalorder %s24, %s25
    %p36 = scmp.eq.s32.totalorder %s16, 0
    %p37 = por %p35, %p36
    %p38 = scmp.ne.s32.totalorder %s24, %s25
    %p39 = scmp.eq.s32.totalorder %s17, 1
    %p40 = por %p38, %p39
    %p42 = scmp.ne.s32.totalorder %s25, %s41
    %p43 = scmp.eq.s32.totalorder %s17, 0
    %p44 = por %p42, %p43
    %s46 = sadd.s32 %s45, 1
    %p49 = scmp.eq.s32.totalorder %s11, 1
    %p50 = scmp.ne.s32.totalorder %s45, %s47
    %p51 = scmp.eq.s32.totalorder %s11, 0
    %p52 = por %p50, %p51
    %p53 = scmp.ne.s32.totalorder %s45, %s47
    %p54 = scmp.eq.s32.totalorder %s16, 1
    %p55 = por %p53, %p54
    %p56 = scmp.ne.s32.totalorder %s47, %s48
    %p57 = scmp.eq.s32.totalorder %s16, 0
    %p58 = por %p56, %p57
    %p59 = scmp.ne.s32.totalorder %s47, %s48
    %p60 = scmp.eq.s32.totalorder %s17, 1
    %p61 = por %p59, %p60
    %p63 = scmp.ne.s32.totalorder %s48, %s62
    %p64 = scmp.eq.s32.totalorder %s17, 0
    %p65 = por %p63, %p64
    %s67 = sadd.s32 %s66, 1
    %p70 = scmp.eq.s32.totalorder %s11, 1
    %p71 = scmp.ne.s32.totalorder %s66, %s68
    %p72 = scmp.eq.s32.totalorder %s11, 0
    %p73 = por %p71, %p72
    %p74 = scmp.ne.s32.totalorder %s66, %s68
    %p75 = scmp.eq.s32.totalorder %s16, 1
    %p76 = por %p74, %p75
    %p77 = scmp.ne.s32.totalorder %s68, %s69
    %p78 = scmp.eq.s32.totalorder %s16, 0
    %p79 = por %p77, %p78
    %p80 = scmp.ne.s32.totalorder %s68, %s69
    %p81 = scmp.eq.s32.totalorder %s17, 1
    %p82 = por %p80, %p81
    %p84 = scmp.ne.s32.totalorder %s69, %s83
    %p85 = scmp.eq.s32.totalorder %s17, 0
    %p86 = por %p84, %p85
    %s88 = sadd.s32 %s87, 1
    %p91 = scmp.eq.s32.totalorder %s11, 1
    %p92 = scmp.ne.s32.totalorder %s87, %s89
    %p93 = scmp.eq.s32.totalorder %s11, 0
    %p94 = por %p92, %p93
    %p95 = scmp.ne.s32.totalorder %s87, %s89
    %p96 = scmp.eq.s32.totalorder %s16, 1
    %p97 = por %p95, %p96
    %p98 = scmp.ne.s32.totalorder %s89, %s90
    %p99 = scmp.eq.s32.totalorder %s16, 0
    %p100 = por %p98, %p99
    %p101 = scmp.ne.s32.totalorder %s89, %s90
    %p102 = scmp.eq.s32.totalorder %s17, 1
    %p103 = por %p101, %p102
    %p105 = scmp.ne.s32.totalorder %s90, %s104
    %p106 = scmp.eq.s32.totalorder %s17, 0
    %p107 = por %p105, %p106
    %s109 = sadd.s32 %s108, 1
    %p112 = scmp.eq.s32.totalorder %s11, 1
    %p113 = scmp.ne.s32.totalorder %s108, %s110
    %p114 = scmp.eq.s32.totalorder %s11, 0
    %p115 = por %p113, %p114
    %p116 = scmp.ne.s32.totalorder %s108, %s110
    %p117 = scmp.eq.s32.totalorder %s16, 1
    %p118 = por %p116, %p117
    %p119 = scmp.ne.s32.totalorder %s110, %s111
    %p120 = scmp.eq.s32.totalorder %s16, 0
    %p121 = por %p119, %p120
    %p122 = scmp.ne.s32.totalorder %s110, %s111
    %p123 = scmp.eq.s32.totalorder %s17, 1
    %p124 = por %p122, %p123
    %p126 = scmp.ne.s32.totalorder %s111, %s125
    %p127 = scmp.eq.s32.totalorder %s17, 0
    %p128 = por %p126, %p127
    %s129 = ssub.s32 %s11, %s18
    %p130 = scmp.eq.s32.totalorder %s129, 0
    %s132 = sadd.s32 %s131, 1
    %s133 = scalar_select %p130, %s131, %s132
    %p136 = pneg %p130
    %p137 = scmp.eq.s32.totalorder %s11, 1
    %p138 = por %p136, %p137
    %p139 = scmp.ne.s32.totalorder %s131, %s134
    %p140 = scmp.eq.s32.totalorder %s11, 0
    %p141 = por %p139, %p140
    %p142 = scmp.ne.s32.totalorder %s131, %s134
    %p143 = scmp.eq.s32.totalorder %s16, 1
    %p144 = por %p142, %p143
    %p145 = scmp.ne.s32.totalorder %s134, %s135
    %p146 = scmp.eq.s32.totalorder %s16, 0
    %p147 = por %p145, %p146
    %p148 = scmp.ne.s32.totalorder %s134, %s135
    %p149 = scmp.eq.s32.totalorder %s17, 1
    %p150 = por %p148, %p149
    %p152 = scmp.ne.s32.totalorder %s135, %s151
    %p153 = scmp.eq.s32.totalorder %s17, 0
    %p154 = por %p152, %p153
    %p155 = scmp.le.s32.totalorder 1, %s11
    %p156 = scmp.lt.s32.totalorder %s11, 3
    %p157 = pnand %p155, %p156
    %p158 = pneg %p157
    // Predicated region
    $region9: #{residual_block.1} parent=5 // pred_check
      _
    $region10: #{residual_block.1} parent=5 // pred_check_branch
      %160 = sbr.rel (%p157) target = $region12
    $region11: #{residual_block.1} parent=5 // pred_region
      %s161 = ssub.s32 %s11, 1
      // Predicated region
      $region13: #{residual_block.1} parent=11 // pred_check
        %p162 = pneg %p58
      $region14: #{residual_block.1} parent=11 // pred_check_branch
        %164 = sbr.rel (%p162) target = $region16
      $region15: #{residual_block.1} parent=11 // pred_region
        _
      $region16: #{residual_block.1} parent=11 // pred_fallthru
        _
      // Predicated region
      $region17: #{residual_block.1} parent=11 // pred_check
        %p165 = pneg %p79
      $region18: #{residual_block.1} parent=11 // pred_check_branch
        %167 = sbr.rel (%p165) target = $region20
      $region19: #{residual_block.1} parent=11 // pred_region
        _
      $region20: #{residual_block.1} parent=11 // pred_fallthru
        _
      // Predicated region
      $region21: #{residual_block.1} parent=11 // pred_check
        %p168 = pneg %p100
      $region22: #{residual_block.1} parent=11 // pred_check_branch
        %170 = sbr.rel (%p168) target = $region24
      $region23: #{residual_block.1} parent=11 // pred_region
        _
      $region24: #{residual_block.1} parent=11 // pred_fallthru
        _
      // Predicated region
      $region25: #{residual_block.1} parent=11 // pred_check
        %p171 = pneg %p121
      $region26: #{residual_block.1} parent=11 // pred_check_branch
        %173 = sbr.rel (%p171) target = $region28
      $region27: #{residual_block.1} parent=11 // pred_region
        _
      $region28: #{residual_block.1} parent=11 // pred_fallthru
        _
    $region12: #{residual_block.1} parent=5 // pred_fallthru
      _
    %p174 = scmp.lt.s32.totalorder %s11, 2
    // Predicated region
    $region29: #{residual_block.1} parent=5 // pred_check
      %p175 = pneg %p174
    $region30: #{residual_block.1} parent=5 // pred_check_branch
      %177 = sbr.rel (%p175) target = $region32
    $region31: #{residual_block.1} parent=5 // pred_region
      // Predicated region
      $region33: #{residual_block.1} parent=31 // pred_check
        %p178 = pneg %p31
      $region34: #{residual_block.1} parent=31 // pred_check_branch
        %180 = sbr.rel (%p178) target = $region36
      $region35: #{residual_block.1} parent=31 // pred_region
        %p181 = scmp.lt.s32.totalorder %s11, 1
        %s182 = scalar_select %p181, %s11, 1
        %s183 = smul.addr %s182, 2
        %s184 = smul.addr %s183, 4
        %s185 = scalar_lea.vmem %s0, %s184
      $region36: #{residual_block.1} parent=31 // pred_fallthru
        _
    $region32: #{residual_block.1} parent=5 // pred_fallthru
      _
    %p186 = scmp.le.s32.totalorder 1, %s11
    %p187 = scmp.lt.s32.totalorder %s11, 3
    %p188 = pnand %p186, %p187
    %p189 = pneg %p188
    // Predicated region
    $region37: #{residual_block.1} parent=5 // pred_check
      _
    $region38: #{residual_block.1} parent=5 // pred_check_branch
      %191 = sbr.rel (%p188) target = $region40
    $region39: #{residual_block.1} parent=5 // pred_region
      %s192 = ssub.s32 %s11, 1
      %p193 = scmp.lt.s32.totalorder %s16, 1
      %s194 = scalar_select %p193, %s16, 1
      %s195 = smul.addr %s194, 2
      %s196 = smul.addr %s195, 4
      %s197 = scalar_lea.vmem %s0, %s196
      %p198 = pneg %p37
      %p199 = pneg %p34
      %p200 = pneg %p58
      %p201 = pneg %p55
      %p202 = pneg %p79
      %p203 = pneg %p76
      %p204 = pneg %p100
      %p205 = pneg %p97
      %p206 = pneg %p121
      %p207 = pneg %p118
      %p208 = pneg %p147
      %p209 = pneg %p144
      %p210 = scmp.lt.s32.totalorder %s16, 1
      %s211 = scalar_select %p210, %s16, 1
      %s212 = smul.addr %s211, 2
      %s213 = smul.addr %s212, 4
      %s214 = scalar_lea.vmem %s5, %s213
      %p215 = scmp.lt.s32.totalorder %s16, 1
      %s216 = scalar_select %p215, %s16, 1
      %s217 = smul.addr %s216, 2
      %s218 = smul.addr %s217, 4
      %s219 = scalar_lea.vmem %s0, %s218
      %p220 = scmp.lt.s32.totalorder %s16, 1
      %s221 = scalar_select %p220, %s16, 1
      %s222 = smul.addr %s221, 2
      %s223 = smul.addr %s222, 4
      %s224 = scalar_lea.vmem %s5, %s223
      %v225 = vld [vmem:[%s219] sm:$0xff]
      %v226 = vlaneseq
      %v227 = vand.u32 %v226, 127
      %v228 = vadd.s32 %v227, 128
      %vm229 = vcmp.lt.s32.totalorder %v227, 0
      %v230 = vsub.s32 0, %v227
      %v231 = vsel %vm229, %v230, %v227
      %v232 = vshrl.u32 %v231, 4
      %v233 = vand.u32 %v231, 15
      %v234 = vsub.s32 0, %v233
      %v235 = vsel %vm229, %v234, %v233
      %vm236 = vcmp.lt.s32.totalorder %v228, 0
      %v237 = vsub.s32 0, %v228
      %v238 = vsel %vm236, %v237, %v228
      %v239 = vshrl.u32 %v238, 4
      %v240 = vand.u32 %v238, 15
      %v241 = vsub.s32 0, %v240
      %v242 = vsel %vm236, %v241, %v240
      %vm243 = vcmp.ne.s32.totalorder %v235, 0
      %vm244 = vcmp.ne.s32.totalorder %v242, 0
      %vm245 = vcmp.lt.s32.totalorder %v235, 0
      %vm246 = vcmp.lt.s32.totalorder %v242, 0
      %vm247 = vmand %vm245, %vm243
      %vm248 = vmand %vm246, %vm244
      %v249 = vadd.s32 %v235, 16
      %v250 = vadd.s32 %v242, 16
      %v251 = vsel %vm247, %v249, %v235
      %v252 = vsel %vm248, %v250, %v242
      %vm253 = vcmp.lt.s32.totalorder %v227, 16
      %vm254 = vcmp.lt.s32.totalorder %v228, 16
      %vm255 = vcmp.ge.s32.totalorder %v227, 240
      %vm256 = vcmp.ge.s32.totalorder %v228, 240
      %vm257 = vcmp.eq.s32.totalorder %v251, 0
      %vm258 = vcmp.eq.s32.totalorder %v252, 0
      %vm259 = vcmp.eq.s32.totalorder %v251, 15
      %vm260 = vcmp.eq.s32.totalorder %v252, 15
      %262 = vst [vmem:[#allocation1] ss:$2 sm:$0xff] %v225
      %v263 = vld.sshfl [vmem:[#allocation1 + $0x8] sm:$0xff pattern:$0x75316420]
      %264 = vrot.lane.b32.xlu0 %v263, 16
      %v265 = vpop.permute.xlu0 %264
      %267 = vst [vmem:[#allocation1] ss:$2 sm:$0xff] %v225
      %v268 = vld.sshfl [vmem:[#allocation1] sm:$0xff pattern:$0x75316420]
      %v269 = vld.sshfl [vmem:[#allocation1 + $0x8] sm:$0xff pattern:$0x75316420]
      %270 = vrot.lane.b32.xlu0 %v268, 16
      %v271 = vpop.permute.xlu0 %270
      %272 = vrot.lane.b32.xlu0 %v269, 16
      %v273 = vpop.permute.xlu0 %272
      %vm274 = vcmask 130048
      %v275 = vsel %vm274, %v271, %v273
      %v278 = vsel %vm274, %v265, %v271
      %279 = vst [vmem:[#allocation1] ss:$2 sm:$0xff] %v225
      %v280 = vld.sshfl [vmem:[#allocation1] sm:$0xff pattern:$0x75316420]
      %v281 = vld.sshfl [vmem:[#allocation1 + $0x8] sm:$0xff pattern:$0x75316420]
      %282 = vrot.lane.b32.xlu0 %v280, 112
      %v283 = vpop.permute.xlu0 %282
      %284 = vrot.lane.b32.xlu0 %v281, 112
      %v285 = vpop.permute.xlu0 %284
      %vm286 = vcmask 916480
      %v287 = vsel %vm286, %v283, %v285
      %290 = vst [vmem:[#allocation1] ss:$2 sm:$0xff] %v225
      %v291 = vld.sshfl [vmem:[#allocation1] sm:$0xff pattern:$0x75316420]
      %292 = vrot.lane.b32.xlu0 %v291, 112
      %v293 = vpop.permute.xlu0 %292
      %v295 = vsel %vm286, %v285, %v293
      %v296 = vsel %vm253, %v287, %v278
      %v297 = vsel %vm254, %v295, %v275
      %v298 = vsel %vm255, %v278, %v287
      %v299 = vsel %vm256, %v275, %v295
      %301 = vrot.lane.b32.xlu0 %v297, 1
      %v302 = vpop.permute.xlu0 %301
      %305 = vrot.lane.b32.xlu0 %v296, 1
      %v306 = vpop.permute.xlu0 %305
      %vm307 = vcmask 7168
      %v308 = vsel %vm307, %v306, %v302
      %v311 = vsel %vm307, %v302, %v306
      %312 = vrot.lane.b32.xlu0 %v296, 127
      %v313 = vpop.permute.xlu0 %312
      %314 = vrot.lane.b32.xlu0 %v297, 127
      %v315 = vpop.permute.xlu0 %314
      %vm316 = vcmask 1039360
      %v317 = vsel %vm316, %v313, %v315
      %v321 = vsel %vm316, %v315, %v313
      %v322 = vsel %vm257, %v317, %v311
      %v323 = vsel %vm258, %v321, %v308
      %v324 = vsel %vm259, %v311, %v317
      %v325 = vsel %vm260, %v308, %v321
      %326 = vst [vmem:[#allocation1] ss:$2 sm:$0xff] %v225
      %v327 = vld.sshfl [vmem:[#allocation1 + $0x8] sm:$0xff pattern:$0x75316420]
      %328 = vrot.lane.b32.xlu0 %v327, 1
      %v329 = vpop.permute.xlu0 %328
      %331 = vst [vmem:[#allocation1] ss:$2 sm:$0xff] %v225
      %v332 = vld.sshfl [vmem:[#allocation1] sm:$0xff pattern:$0x75316420]
      %v333 = vld.sshfl [vmem:[#allocation1 + $0x8] sm:$0xff pattern:$0x75316420]
      %334 = vrot.lane.b32.xlu0 %v332, 1
      %v335 = vpop.permute.xlu0 %334
      %336 = vrot.lane.b32.xlu0 %v333, 1
      %v337 = vpop.permute.xlu0 %336
      %v338 = vsel %vm307, %v335, %v337
      %v341 = vsel %vm307, %v329, %v335
      %342 = vst [vmem:[#allocation1] ss:$2 sm:$0xff] %v225
      %v343 = vld.sshfl [vmem:[#allocation1] sm:$0xff pattern:$0x75316420]
      %v344 = vld.sshfl [vmem:[#allocation1 + $0x8] sm:$0xff pattern:$0x75316420]
      %345 = vrot.lane.b32.xlu0 %v343, 127
      %v346 = vpop.permute.xlu0 %345
      %347 = vrot.lane.b32.xlu0 %v344, 127
      %v348 = vpop.permute.xlu0 %347
      %v349 = vsel %vm316, %v346, %v348
      %352 = vst [vmem:[#allocation1] ss:$2 sm:$0xff] %v225
      %v353 = vld.sshfl [vmem:[#allocation1] sm:$0xff pattern:$0x75316420]
      %354 = vrot.lane.b32.xlu0 %v353, 127
      %v355 = vpop.permute.xlu0 %354
      %v357 = vsel %vm316, %v348, %v355
      %v358 = vsel %vm257, %v349, %v341
      %v359 = vsel %vm258, %v357, %v338
      %v360 = vsel %vm259, %v341, %v349
      %v361 = vsel %vm260, %v338, %v357
      %363 = vrot.lane.b32.xlu0 %v299, 1
      %v364 = vpop.permute.xlu0 %363
      %367 = vrot.lane.b32.xlu0 %v298, 1
      %v368 = vpop.permute.xlu0 %367
      %v369 = vsel %vm307, %v368, %v364
      %v372 = vsel %vm307, %v364, %v368
      %373 = vrot.lane.b32.xlu0 %v298, 127
      %v374 = vpop.permute.xlu0 %373
      %375 = vrot.lane.b32.xlu0 %v299, 127
      %v376 = vpop.permute.xlu0 %375
      %v377 = vsel %vm316, %v374, %v376
      %v381 = vsel %vm316, %v376, %v374
      %v382 = vsel %vm257, %v377, %v372
      %v383 = vsel %vm258, %v381, %v369
      %v384 = vsel %vm259, %v372, %v377
      %v385 = vsel %vm260, %v369, %v381
      %v386 = vld [vmem:[%s1] sm:$0xf]
      %s387 = scalar_lea.vmem %s1, 4
      %v388 = vld [vmem:[%s387] sm:$0xf]
      %vm389 = vcmask 31744
      %v391 = vsel %vm389, %v388, 0
      %vm393 = vcmask 1043456
      %v394 = vsel %vm393, %v296, 0
      %v396 = vsel %vm393, %v297, 0
      %398 = vmatpush.msra.mxu0 0.0
      %399 = vmatpush.msra.mxu0 0.0
      %400 = vmatpush.msra.mxu0 0.0
      %401 = vmatpush.msra.mxu0 0.0
      %402 = vmatpush.msra.mxu0 0.0
      %403 = vmatpush.msra.mxu0 0.0
      %404 = vmatpush.msra.mxu0 0.0
      %405 = vmatpush.msra.mxu0 0.0
      %406 = vmatpush.msra.mxu0 0.0
      %407 = vmatpush.msra.mxu0 0.0
      %408 = vmatpush.msra.mxu0 0.0
      %409 = vmatpush.msra.mxu0 0.0
      %410 = vmatpush.msra.mxu0 0.0
      %411 = vmatpush.msra.mxu0 0.0
      %412 = vmatpush.msra.mxu0 0.0
      %413 = vmatpush.msra.mxu0 %v394
      %414 = vmatmul.f32.gmra.mxu0 %v391
      %v415 = vpop.f32.mrf.mxu0
      %v416 = vadd.f32 0.0, %v415
      %417 = vdwg.mxu0
      %418 = vmatpush.msra.mxu0 0.0
      %419 = vmatpush.msra.mxu0 0.0
      %420 = vmatpush.msra.mxu0 0.0
      %421 = vmatpush.msra.mxu0 0.0
      %422 = vmatpush.msra.mxu0 0.0
      %423 = vmatpush.msra.mxu0 0.0
      %424 = vmatpush.msra.mxu0 0.0
      %425 = vmatpush.msra.mxu0 0.0
      %426 = vmatpush.msra.mxu0 0.0
      %427 = vmatpush.msra.mxu0 0.0
      %428 = vmatpush.msra.mxu0 0.0
      %429 = vmatpush.msra.mxu0 0.0
      %430 = vmatpush.msra.mxu0 0.0
      %431 = vmatpush.msra.mxu0 0.0
      %432 = vmatpush.msra.mxu0 0.0
      %433 = vmatpush.msra.mxu0 %v396
      %434 = vmatmul.f32.gmra.mxu0 %v391
      %v435 = vpop.f32.mrf.mxu0
      %v436 = vadd.f32 0.0, %v435
      %437 = vdwg.mxu0
      %v439 = vsel %vm389, %v386, 0
      %v442 = vsel %vm393, %v322, 0
      %v445 = vsel %vm393, %v323, 0
      %447 = vmatpush.msra.mxu0 0.0
      %448 = vmatpush.msra.mxu0 0.0
      %449 = vmatpush.msra.mxu0 0.0
      %450 = vmatpush.msra.mxu0 0.0
      %451 = vmatpush.msra.mxu0 0.0
      %452 = vmatpush.msra.mxu0 0.0
      %453 = vmatpush.msra.mxu0 0.0
      %454 = vmatpush.msra.mxu0 0.0
      %455 = vmatpush.msra.mxu0 0.0
      %456 = vmatpush.msra.mxu0 0.0
      %457 = vmatpush.msra.mxu0 0.0
      %458 = vmatpush.msra.mxu0 0.0
      %459 = vmatpush.msra.mxu0 0.0
      %460 = vmatpush.msra.mxu0 0.0
      %461 = vmatpush.msra.mxu0 0.0
      %462 = vmatpush.msra.mxu0 %v442
      %463 = vmatmul.f32.gmra.mxu0 %v439
      %v464 = vpop.f32.mrf.mxu0
      %v465 = vadd.f32 %v416, %v464
      %466 = vdwg.mxu0
      %467 = vmatpush.msra.mxu0 0.0
      %468 = vmatpush.msra.mxu0 0.0
      %469 = vmatpush.msra.mxu0 0.0
      %470 = vmatpush.msra.mxu0 0.0
      %471 = vmatpush.msra.mxu0 0.0
      %472 = vmatpush.msra.mxu0 0.0
      %473 = vmatpush.msra.mxu0 0.0
      %474 = vmatpush.msra.mxu0 0.0
      %475 = vmatpush.msra.mxu0 0.0
      %476 = vmatpush.msra.mxu0 0.0
      %477 = vmatpush.msra.mxu0 0.0
      %478 = vmatpush.msra.mxu0 0.0
      %479 = vmatpush.msra.mxu0 0.0
      %480 = vmatpush.msra.mxu0 0.0
      %481 = vmatpush.msra.mxu0 0.0
      %482 = vmatpush.msra.mxu0 %v445
      %483 = vmatmul.f32.gmra.mxu0 %v439
      %v484 = vpop.f32.mrf.mxu0
      %v485 = vadd.f32 %v436, %v484
      %486 = vdwg.mxu0
      %s487 = scalar_lea.vmem %s1, 8
      %v488 = vld [vmem:[%s487] sm:$0xf]
      %v490 = vsel %vm389, %v488, 0
      %v493 = vsel %vm393, %v324, 0
      %v496 = vsel %vm393, %v325, 0
      %498 = vmatpush.msra.mxu0 0.0
      %499 = vmatpush.msra.mxu0 0.0
      %500 = vmatpush.msra.mxu0 0.0
      %501 = vmatpush.msra.mxu0 0.0
      %502 = vmatpush.msra.mxu0 0.0
      %503 = vmatpush.msra.mxu0 0.0
      %504 = vmatpush.msra.mxu0 0.0
      %505 = vmatpush.msra.mxu0 0.0
      %506 = vmatpush.msra.mxu0 0.0
      %507 = vmatpush.msra.mxu0 0.0
      %508 = vmatpush.msra.mxu0 0.0
      %509 = vmatpush.msra.mxu0 0.0
      %510 = vmatpush.msra.mxu0 0.0
      %511 = vmatpush.msra.mxu0 0.0
      %512 = vmatpush.msra.mxu0 0.0
      %513 = vmatpush.msra.mxu0 %v493
      %514 = vmatmul.f32.gmra.mxu0 %v490
      %v515 = vpop.f32.mrf.mxu0
      %v516 = vadd.f32 0.0, %v515
      %517 = vdwg.mxu0
      %518 = vmatpush.msra.mxu0 0.0
      %519 = vmatpush.msra.mxu0 0.0
      %520 = vmatpush.msra.mxu0 0.0
      %521 = vmatpush.msra.mxu0 0.0
      %522 = vmatpush.msra.mxu0 0.0
      %523 = vmatpush.msra.mxu0 0.0
      %524 = vmatpush.msra.mxu0 0.0
      %525 = vmatpush.msra.mxu0 0.0
      %526 = vmatpush.msra.mxu0 0.0
      %527 = vmatpush.msra.mxu0 0.0
      %528 = vmatpush.msra.mxu0 0.0
      %529 = vmatpush.msra.mxu0 0.0
      %530 = vmatpush.msra.mxu0 0.0
      %531 = vmatpush.msra.mxu0 0.0
      %532 = vmatpush.msra.mxu0 0.0
      %533 = vmatpush.msra.mxu0 %v496
      %534 = vmatmul.f32.gmra.mxu0 %v490
      %v535 = vpop.f32.mrf.mxu0
      %v536 = vadd.f32 0.0, %v535
      %537 = vdwg.mxu0
      %v538 = vadd.f32 %v465, %v516
      %v539 = vadd.f32 %v485, %v536
      %s540 = scalar_lea.vmem %s1, 12
      %v541 = vld [vmem:[%s540] sm:$0xf]
      %v543 = vsel %vm389, %v541, 0
      %v546 = vsel %vm393, %v358, 0
      %v549 = vsel %vm393, %v359, 0
      %551 = vmatpush.msra.mxu0 0.0
      %552 = vmatpush.msra.mxu0 0.0
      %553 = vmatpush.msra.mxu0 0.0
      %554 = vmatpush.msra.mxu0 0.0
      %555 = vmatpush.msra.mxu0 0.0
      %556 = vmatpush.msra.mxu0 0.0
      %557 = vmatpush.msra.mxu0 0.0
      %558 = vmatpush.msra.mxu0 0.0
      %559 = vmatpush.msra.mxu0 0.0
      %560 = vmatpush.msra.mxu0 0.0
      %561 = vmatpush.msra.mxu0 0.0
      %562 = vmatpush.msra.mxu0 0.0
      %563 = vmatpush.msra.mxu0 0.0
      %564 = vmatpush.msra.mxu0 0.0
      %565 = vmatpush.msra.mxu0 0.0
      %566 = vmatpush.msra.mxu0 %v546
      %567 = vmatmul.f32.gmra.mxu0 %v543
      %v568 = vpop.f32.mrf.mxu0
      %v569 = vadd.f32 0.0, %v568
      %570 = vdwg.mxu0
      %571 = vmatpush.msra.mxu0 0.0
      %572 = vmatpush.msra.mxu0 0.0
      %573 = vmatpush.msra.mxu0 0.0
      %574 = vmatpush.msra.mxu0 0.0
      %575 = vmatpush.msra.mxu0 0.0
      %576 = vmatpush.msra.mxu0 0.0
      %577 = vmatpush.msra.mxu0 0.0
      %578 = vmatpush.msra.mxu0 0.0
      %579 = vmatpush.msra.mxu0 0.0
      %580 = vmatpush.msra.mxu0 0.0
      %581 = vmatpush.msra.mxu0 0.0
      %582 = vmatpush.msra.mxu0 0.0
      %583 = vmatpush.msra.mxu0 0.0
      %584 = vmatpush.msra.mxu0 0.0
      %585 = vmatpush.msra.mxu0 0.0
      %586 = vmatpush.msra.mxu0 %v549
      %587 = vmatmul.f32.gmra.mxu0 %v543
      %v588 = vpop.f32.mrf.mxu0
      %v589 = vadd.f32 0.0, %v588
      %590 = vdwg.mxu0
      %v591 = vadd.f32 %v538, %v569
      %v592 = vadd.f32 %v539, %v589
      %s593 = scalar_lea.vmem %s1, 16
      %v594 = vld [vmem:[%s593] sm:$0xf]
      %595 = vst [vmem:[#allocation1] ss:$2 sm:$0xff] %v225
      %v596 = vld.sshfl [vmem:[#allocation1] sm:$0xff pattern:$0x75316420]
      %v597 = vld.sshfl [vmem:[#allocation1 + $0x8] sm:$0xff pattern:$0x75316420]
      %v599 = vsel %vm389, %v594, 0
      %v601 = vsel %vm393, %v596, 0
      %v603 = vsel %vm393, %v597, 0
      %605 = vmatpush.msra.mxu0 0.0
      %606 = vmatpush.msra.mxu0 0.0
      %607 = vmatpush.msra.mxu0 0.0
      %608 = vmatpush.msra.mxu0 0.0
      %609 = vmatpush.msra.mxu0 0.0
      %610 = vmatpush.msra.mxu0 0.0
      %611 = vmatpush.msra.mxu0 0.0
      %612 = vmatpush.msra.mxu0 0.0
      %613 = vmatpush.msra.mxu0 0.0
      %614 = vmatpush.msra.mxu0 0.0
      %615 = vmatpush.msra.mxu0 0.0
      %616 = vmatpush.msra.mxu0 0.0
      %617 = vmatpush.msra.mxu0 0.0
      %618 = vmatpush.msra.mxu0 0.0
      %619 = vmatpush.msra.mxu0 0.0
      %620 = vmatpush.msra.mxu0 %v601
      %621 = vmatmul.f32.gmra.mxu0 %v599
      %v622 = vpop.f32.mrf.mxu0
      %v623 = vadd.f32 0.0, %v622
      %624 = vdwg.mxu0
      %625 = vmatpush.msra.mxu0 0.0
      %626 = vmatpush.msra.mxu0 0.0
      %627 = vmatpush.msra.mxu0 0.0
      %628 = vmatpush.msra.mxu0 0.0
      %629 = vmatpush.msra.mxu0 0.0
      %630 = vmatpush.msra.mxu0 0.0
      %631 = vmatpush.msra.mxu0 0.0
      %632 = vmatpush.msra.mxu0 0.0
      %633 = vmatpush.msra.mxu0 0.0
      %634 = vmatpush.msra.mxu0 0.0
      %635 = vmatpush.msra.mxu0 0.0
      %636 = vmatpush.msra.mxu0 0.0
      %637 = vmatpush.msra.mxu0 0.0
      %638 = vmatpush.msra.mxu0 0.0
      %639 = vmatpush.msra.mxu0 0.0
      %640 = vmatpush.msra.mxu0 %v603
      %641 = vmatmul.f32.gmra.mxu0 %v599
      %v642 = vpop.f32.mrf.mxu0
      %v643 = vadd.f32 0.0, %v642
      %644 = vdwg.mxu0
      %v645 = vadd.f32 %v591, %v623
      %v646 = vadd.f32 %v592, %v643
      %s647 = scalar_lea.vmem %s1, 20
      %v648 = vld [vmem:[%s647] sm:$0xf]
      %v650 = vsel %vm389, %v648, 0
      %v653 = vsel %vm393, %v360, 0
      %v656 = vsel %vm393, %v361, 0
      %658 = vmatpush.msra.mxu0 0.0
      %659 = vmatpush.msra.mxu0 0.0
      %660 = vmatpush.msra.mxu0 0.0
      %661 = vmatpush.msra.mxu0 0.0
      %662 = vmatpush.msra.mxu0 0.0
      %663 = vmatpush.msra.mxu0 0.0
      %664 = vmatpush.msra.mxu0 0.0
      %665 = vmatpush.msra.mxu0 0.0
      %666 = vmatpush.msra.mxu0 0.0
      %667 = vmatpush.msra.mxu0 0.0
      %668 = vmatpush.msra.mxu0 0.0
      %669 = vmatpush.msra.mxu0 0.0
      %670 = vmatpush.msra.mxu0 0.0
      %671 = vmatpush.msra.mxu0 0.0
      %672 = vmatpush.msra.mxu0 0.0
      %673 = vmatpush.msra.mxu0 %v653
      %674 = vmatmul.f32.gmra.mxu0 %v650
      %v675 = vpop.f32.mrf.mxu0
      %v676 = vadd.f32 0.0, %v675
      %677 = vdwg.mxu0
      %678 = vmatpush.msra.mxu0 0.0
      %679 = vmatpush.msra.mxu0 0.0
      %680 = vmatpush.msra.mxu0 0.0
      %681 = vmatpush.msra.mxu0 0.0
      %682 = vmatpush.msra.mxu0 0.0
      %683 = vmatpush.msra.mxu0 0.0
      %684 = vmatpush.msra.mxu0 0.0
      %685 = vmatpush.msra.mxu0 0.0
      %686 = vmatpush.msra.mxu0 0.0
      %687 = vmatpush.msra.mxu0 0.0
      %688 = vmatpush.msra.mxu0 0.0
      %689 = vmatpush.msra.mxu0 0.0
      %690 = vmatpush.msra.mxu0 0.0
      %691 = vmatpush.msra.mxu0 0.0
      %692 = vmatpush.msra.mxu0 0.0
      %693 = vmatpush.msra.mxu0 %v656
      %694 = vmatmul.f32.gmra.mxu0 %v650
      %v695 = vpop.f32.mrf.mxu0
      %v696 = vadd.f32 0.0, %v695
      %697 = vdwg.mxu0
      %v698 = vadd.f32 %v645, %v676
      %v699 = vadd.f32 %v646, %v696
      %s700 = scalar_lea.vmem %s1, 24
      %v701 = vld [vmem:[%s700] sm:$0xf]
      %v703 = vsel %vm389, %v701, 0
      %v706 = vsel %vm393, %v382, 0
      %v709 = vsel %vm393, %v383, 0
      %711 = vmatpush.msra.mxu0 0.0
      %712 = vmatpush.msra.mxu0 0.0
      %713 = vmatpush.msra.mxu0 0.0
      %714 = vmatpush.msra.mxu0 0.0
      %715 = vmatpush.msra.mxu0 0.0
      %716 = vmatpush.msra.mxu0 0.0
      %717 = vmatpush.msra.mxu0 0.0
      %718 = vmatpush.msra.mxu0 0.0
      %719 = vmatpush.msra.mxu0 0.0
      %720 = vmatpush.msra.mxu0 0.0
      %721 = vmatpush.msra.mxu0 0.0
      %722 = vmatpush.msra.mxu0 0.0
      %723 = vmatpush.msra.mxu0 0.0
      %724 = vmatpush.msra.mxu0 0.0
      %725 = vmatpush.msra.mxu0 0.0
      %726 = vmatpush.msra.mxu0 %v706
      %727 = vmatmul.f32.gmra.mxu0 %v703
      %v728 = vpop.f32.mrf.mxu0
      %v729 = vadd.f32 0.0, %v728
      %730 = vdwg.mxu0
      %731 = vmatpush.msra.mxu0 0.0
      %732 = vmatpush.msra.mxu0 0.0
      %733 = vmatpush.msra.mxu0 0.0
      %734 = vmatpush.msra.mxu0 0.0
      %735 = vmatpush.msra.mxu0 0.0
      %736 = vmatpush.msra.mxu0 0.0
      %737 = vmatpush.msra.mxu0 0.0
      %738 = vmatpush.msra.mxu0 0.0
      %739 = vmatpush.msra.mxu0 0.0
      %740 = vmatpush.msra.mxu0 0.0
      %741 = vmatpush.msra.mxu0 0.0
      %742 = vmatpush.msra.mxu0 0.0
      %743 = vmatpush.msra.mxu0 0.0
      %744 = vmatpush.msra.mxu0 0.0
      %745 = vmatpush.msra.mxu0 0.0
      %746 = vmatpush.msra.mxu0 %v709
      %747 = vmatmul.f32.gmra.mxu0 %v703
      %v748 = vpop.f32.mrf.mxu0
      %v749 = vadd.f32 0.0, %v748
      %750 = vdwg.mxu0
      %v751 = vadd.f32 %v698, %v729
      %v752 = vadd.f32 %v699, %v749
      %s753 = scalar_lea.vmem %s1, 28
      %v754 = vld [vmem:[%s753] sm:$0xf]
      %v756 = vsel %vm389, %v754, 0
      %v758 = vsel %vm393, %v298, 0
      %v760 = vsel %vm393, %v299, 0
      %762 = vmatpush.msra.mxu0 0.0
      %763 = vmatpush.msra.mxu0 0.0
      %764 = vmatpush.msra.mxu0 0.0
      %765 = vmatpush.msra.mxu0 0.0
      %766 = vmatpush.msra.mxu0 0.0
      %767 = vmatpush.msra.mxu0 0.0
      %768 = vmatpush.msra.mxu0 0.0
      %769 = vmatpush.msra.mxu0 0.0
      %770 = vmatpush.msra.mxu0 0.0
      %771 = vmatpush.msra.mxu0 0.0
      %772 = vmatpush.msra.mxu0 0.0
      %773 = vmatpush.msra.mxu0 0.0
      %774 = vmatpush.msra.mxu0 0.0
      %775 = vmatpush.msra.mxu0 0.0
      %776 = vmatpush.msra.mxu0 0.0
      %777 = vmatpush.msra.mxu0 %v758
      %778 = vmatmul.f32.gmra.mxu0 %v756
      %v779 = vpop.f32.mrf.mxu0
      %v780 = vadd.f32 0.0, %v779
      %781 = vdwg.mxu0
      %782 = vmatpush.msra.mxu0 0.0
      %783 = vmatpush.msra.mxu0 0.0
      %784 = vmatpush.msra.mxu0 0.0
      %785 = vmatpush.msra.mxu0 0.0
      %786 = vmatpush.msra.mxu0 0.0
      %787 = vmatpush.msra.mxu0 0.0
      %788 = vmatpush.msra.mxu0 0.0
      %789 = vmatpush.msra.mxu0 0.0
      %790 = vmatpush.msra.mxu0 0.0
      %791 = vmatpush.msra.mxu0 0.0
      %792 = vmatpush.msra.mxu0 0.0
      %793 = vmatpush.msra.mxu0 0.0
      %794 = vmatpush.msra.mxu0 0.0
      %795 = vmatpush.msra.mxu0 0.0
      %796 = vmatpush.msra.mxu0 0.0
      %797 = vmatpush.msra.mxu0 %v760
      %798 = vmatmul.f32.gmra.mxu0 %v756
      %v799 = vpop.f32.mrf.mxu0
      %v800 = vadd.f32 0.0, %v799
      %801 = vdwg.mxu0
      %v802 = vadd.f32 %v751, %v780
      %v803 = vadd.f32 %v752, %v800
      %s804 = scalar_lea.vmem %s1, 32
      %v805 = vld [vmem:[%s804] sm:$0xf]
      %v807 = vsel %vm389, %v805, 0
      %v810 = vsel %vm393, %v384, 0
      %v813 = vsel %vm393, %v385, 0
      %815 = vmatpush.msra.mxu0 0.0
      %816 = vmatpush.msra.mxu0 0.0
      %817 = vmatpush.msra.mxu0 0.0
      %818 = vmatpush.msra.mxu0 0.0
      %819 = vmatpush.msra.mxu0 0.0
      %820 = vmatpush.msra.mxu0 0.0
      %821 = vmatpush.msra.mxu0 0.0
      %822 = vmatpush.msra.mxu0 0.0
      %823 = vmatpush.msra.mxu0 0.0
      %824 = vmatpush.msra.mxu0 0.0
      %825 = vmatpush.msra.mxu0 0.0
      %826 = vmatpush.msra.mxu0 0.0
      %827 = vmatpush.msra.mxu0 0.0
      %828 = vmatpush.msra.mxu0 0.0
      %829 = vmatpush.msra.mxu0 0.0
      %830 = vmatpush.msra.mxu0 %v810
      %831 = vmatmul.f32.gmra.mxu0 %v807
      %v832 = vpop.f32.mrf.mxu0
      %v833 = vadd.f32 0.0, %v832
      %834 = vdwg.mxu0
      %835 = vmatpush.msra.mxu0 0.0
      %836 = vmatpush.msra.mxu0 0.0
      %837 = vmatpush.msra.mxu0 0.0
      %838 = vmatpush.msra.mxu0 0.0
      %839 = vmatpush.msra.mxu0 0.0
      %840 = vmatpush.msra.mxu0 0.0
      %841 = vmatpush.msra.mxu0 0.0
      %842 = vmatpush.msra.mxu0 0.0
      %843 = vmatpush.msra.mxu0 0.0
      %844 = vmatpush.msra.mxu0 0.0
      %845 = vmatpush.msra.mxu0 0.0
      %846 = vmatpush.msra.mxu0 0.0
      %847 = vmatpush.msra.mxu0 0.0
      %848 = vmatpush.msra.mxu0 0.0
      %849 = vmatpush.msra.mxu0 0.0
      %850 = vmatpush.msra.mxu0 %v813
      %851 = vmatmul.f32.gmra.mxu0 %v807
      %v852 = vpop.f32.mrf.mxu0
      %v853 = vadd.f32 0.0, %v852
      %854 = vdwg.mxu0
      %v855 = vadd.f32 %v802, %v833
      %v856 = vadd.f32 %v803, %v853
      %v857 = vld [vmem:[%s2] sm:$0xf]
      %859 = vset.pattern.permute.xlu0 0
      %860 = vperm.xlu0 %859, %v857
      %v861 = vpop.permute.xlu0 %860
      %v863 = vadd.f32 %v855, %v861
      %v864 = vadd.f32 %v856, %v861
      %v865 = vsel %vm393, %v863, 0.0
      %v866 = vsel %vm393, %v864, 0.0
      %v867 = vadd.f32 %v865, %v866
      %868 = vadd.xlane.f32.xlu0 %v867
      %v869 = vpop.xlane.xlu0 %868
      %v870 = vmul.f32 %v863, %v863
      %v871 = vmul.f32 %v864, %v864
      %v872 = vsel %vm393, %v870, 0.0
      %v873 = vsel %vm393, %v871, 0.0
      %v874 = vadd.f32 %v872, %v873
      %875 = vadd.xlane.f32.xlu0 %v874
      %v876 = vpop.xlane.xlu0 %875
      %v877 = vmul.f32 %v869, 0.00390625
      %v878 = vmul.f32 %v876, 0.00390625
      %v879 = vmul.f32 %v877, %v877
      %v880 = vsub.f32 %v878, %v879
      %v881 = vmax.f32 %v880, 0.0
      %v882 = vsub.f32 %v863, %v877
      %v883 = vsub.f32 %v864, %v877
      %v884 = vadd.f32 %v881, 1e-05
      %v885 = vrsqrt.pop %v884
      %v886 = vmul.f32 %v885, %v884
      %v887 = vmul.f32 %v886, %v885
      %v888 = vmul.f32 0.5, %v887
      %v889 = vsub.f32 1.5, %v888
      %v890 = vmul.f32 %v885, %v889
      %vm891 = vweird.f32 %v884
      %vm892 = vweird.f32 %v885
      %vm893 = vmor %vm891, %vm892
      %v894 = vsel %vm893, %v885, %v890
      %v895 = vmul.f32 %v882, %v894
      %v896 = vmul.f32 %v883, %v894
      %v897 = vmax.f32 %v895, 0.0
      %v898 = vmax.f32 %v896, 0.0
      %900 = vrot.lane.b32.xlu0 %v898, 16
      %v901 = vpop.permute.xlu0 %900
      %904 = vrot.lane.b32.xlu0 %v897, 16
      %v905 = vpop.permute.xlu0 %904
      %v906 = vsel %vm274, %v905, %v901
      %v909 = vsel %vm274, %v901, %v905
      %910 = vrot.lane.b32.xlu0 %v897, 112
      %v911 = vpop.permute.xlu0 %910
      %912 = vrot.lane.b32.xlu0 %v898, 112
      %v913 = vpop.permute.xlu0 %912
      %v914 = vsel %vm286, %v911, %v913
      %v918 = vsel %vm286, %v913, %v911
      %v919 = vsel %vm253, %v914, %v909
      %v920 = vsel %vm254, %v918, %v906
      %v921 = vsel %vm255, %v909, %v914
      %v922 = vsel %vm256, %v906, %v918
      %924 = vrot.lane.b32.xlu0 %v920, 1
      %v925 = vpop.permute.xlu0 %924
      %928 = vrot.lane.b32.xlu0 %v919, 1
      %v929 = vpop.permute.xlu0 %928
      %v930 = vsel %vm307, %v929, %v925
      %v933 = vsel %vm307, %v925, %v929
      %934 = vrot.lane.b32.xlu0 %v919, 127
      %v935 = vpop.permute.xlu0 %934
      %936 = vrot.lane.b32.xlu0 %v920, 127
      %v937 = vpop.permute.xlu0 %936
      %v938 = vsel %vm316, %v935, %v937
      %v942 = vsel %vm316, %v937, %v935
      %v943 = vsel %vm257, %v938, %v933
      %v944 = vsel %vm258, %v942, %v930
      %v945 = vsel %vm259, %v933, %v938
      %v946 = vsel %vm260, %v930, %v942
      %947 = vrot.lane.b32.xlu0 %v898, 1
      %v948 = vpop.permute.xlu0 %947
      %950 = vrot.lane.b32.xlu0 %v897, 1
      %v951 = vpop.permute.xlu0 %950
      %v952 = vsel %vm307, %v951, %v948
      %v955 = vsel %vm307, %v948, %v951
      %956 = vrot.lane.b32.xlu0 %v897, 127
      %v957 = vpop.permute.xlu0 %956
      %958 = vrot.lane.b32.xlu0 %v898, 127
      %v959 = vpop.permute.xlu0 %958
      %v960 = vsel %vm316, %v957, %v959
      %v964 = vsel %vm316, %v959, %v957
      %v965 = vsel %vm257, %v960, %v955
      %v966 = vsel %vm258, %v964, %v952
      %v967 = vsel %vm259, %v955, %v960
      %v968 = vsel %vm260, %v952, %v964
      %970 = vrot.lane.b32.xlu0 %v922, 1
      %v971 = vpop.permute.xlu0 %970
      %974 = vrot.lane.b32.xlu0 %v921, 1
      %v975 = vpop.permute.xlu0 %974
      %v976 = vsel %vm307, %v975, %v971
      %v979 = vsel %vm307, %v971, %v975
      %980 = vrot.lane.b32.xlu0 %v921, 127
      %v981 = vpop.permute.xlu0 %980
      %982 = vrot.lane.b32.xlu0 %v922, 127
      %v983 = vpop.permute.xlu0 %982
      %v984 = vsel %vm316, %v981, %v983
      %v988 = vsel %vm316, %v983, %v981
      %v989 = vsel %vm257, %v984, %v979
      %v990 = vsel %vm258, %v988, %v976
      %v991 = vsel %vm259, %v979, %v984
      %v992 = vsel %vm260, %v976, %v988
      %v993 = vld [vmem:[%s3] sm:$0xf]
      %s994 = scalar_lea.vmem %s3, 4
      %v995 = vld [vmem:[%s994] sm:$0xf]
      %v997 = vsel %vm389, %v995, 0
      %v999 = vsel %vm393, %v919, 0
      %v1001 = vsel %vm393, %v920, 0
      %1003 = vmatpush.msra.mxu0 0.0
      %1004 = vmatpush.msra.mxu0 0.0
      %1005 = vmatpush.msra.mxu0 0.0
      %1006 = vmatpush.msra.mxu0 0.0
      %1007 = vmatpush.msra.mxu0 0.0
      %1008 = vmatpush.msra.mxu0 0.0
      %1009 = vmatpush.msra.mxu0 0.0
      %1010 = vmatpush.msra.mxu0 0.0
      %1011 = vmatpush.msra.mxu0 0.0
      %1012 = vmatpush.msra.mxu0 0.0
      %1013 = vmatpush.msra.mxu0 0.0
      %1014 = vmatpush.msra.mxu0 0.0
      %1015 = vmatpush.msra.mxu0 0.0
      %1016 = vmatpush.msra.mxu0 0.0
      %1017 = vmatpush.msra.mxu0 0.0
      %1018 = vmatpush.msra.mxu0 %v999
      %1019 = vmatmul.f32.gmra.mxu0 %v997
      %v1020 = vpop.f32.mrf.mxu0
      %v1021 = vadd.f32 0.0, %v1020
      %1022 = vdwg.mxu0
      %1023 = vmatpush.msra.mxu0 0.0
      %1024 = vmatpush.msra.mxu0 0.0
      %1025 = vmatpush.msra.mxu0 0.0
      %1026 = vmatpush.msra.mxu0 0.0
      %1027 = vmatpush.msra.mxu0 0.0
      %1028 = vmatpush.msra.mxu0 0.0
      %1029 = vmatpush.msra.mxu0 0.0
      %1030 = vmatpush.msra.mxu0 0.0
      %1031 = vmatpush.msra.mxu0 0.0
      %1032 = vmatpush.msra.mxu0 0.0
      %1033 = vmatpush.msra.mxu0 0.0
      %1034 = vmatpush.msra.mxu0 0.0
      %1035 = vmatpush.msra.mxu0 0.0
      %1036 = vmatpush.msra.mxu0 0.0
      %1037 = vmatpush.msra.mxu0 0.0
      %1038 = vmatpush.msra.mxu0 %v1001
      %1039 = vmatmul.f32.gmra.mxu0 %v997
      %v1040 = vpop.f32.mrf.mxu0
      %v1041 = vadd.f32 0.0, %v1040
      %1042 = vdwg.mxu0
      %v1044 = vsel %vm389, %v993, 0
      %v1047 = vsel %vm393, %v943, 0
      %v1050 = vsel %vm393, %v944, 0
      %1052 = vmatpush.msra.mxu0 0.0
      %1053 = vmatpush.msra.mxu0 0.0
      %1054 = vmatpush.msra.mxu0 0.0
      %1055 = vmatpush.msra.mxu0 0.0
      %1056 = vmatpush.msra.mxu0 0.0
      %1057 = vmatpush.msra.mxu0 0.0
      %1058 = vmatpush.msra.mxu0 0.0
      %1059 = vmatpush.msra.mxu0 0.0
      %1060 = vmatpush.msra.mxu0 0.0
      %1061 = vmatpush.msra.mxu0 0.0
      %1062 = vmatpush.msra.mxu0 0.0
      %1063 = vmatpush.msra.mxu0 0.0
      %1064 = vmatpush.msra.mxu0 0.0
      %1065 = vmatpush.msra.mxu0 0.0
      %1066 = vmatpush.msra.mxu0 0.0
      %1067 = vmatpush.msra.mxu0 %v1047
      %1068 = vmatmul.f32.gmra.mxu0 %v1044
      %v1069 = vpop.f32.mrf.mxu0
      %v1070 = vadd.f32 %v1021, %v1069
      %1071 = vdwg.mxu0
      %1072 = vmatpush.msra.mxu0 0.0
      %1073 = vmatpush.msra.mxu0 0.0
      %1074 = vmatpush.msra.mxu0 0.0
      %1075 = vmatpush.msra.mxu0 0.0
      %1076 = vmatpush.msra.mxu0 0.0
      %1077 = vmatpush.msra.mxu0 0.0
      %1078 = vmatpush.msra.mxu0 0.0
      %1079 = vmatpush.msra.mxu0 0.0
      %1080 = vmatpush.msra.mxu0 0.0
      %1081 = vmatpush.msra.mxu0 0.0
      %1082 = vmatpush.msra.mxu0 0.0
      %1083 = vmatpush.msra.mxu0 0.0
      %1084 = vmatpush.msra.mxu0 0.0
      %1085 = vmatpush.msra.mxu0 0.0
      %1086 = vmatpush.msra.mxu0 0.0
      %1087 = vmatpush.msra.mxu0 %v1050
      %1088 = vmatmul.f32.gmra.mxu0 %v1044
      %v1089 = vpop.f32.mrf.mxu0
      %v1090 = vadd.f32 %v1041, %v1089
      %1091 = vdwg.mxu0
      %s1092 = scalar_lea.vmem %s3, 8
      %v1093 = vld [vmem:[%s1092] sm:$0xf]
      %v1095 = vsel %vm389, %v1093, 0
      %v1098 = vsel %vm393, %v945, 0
      %v1101 = vsel %vm393, %v946, 0
      %1103 = vmatpush.msra.mxu0 0.0
      %1104 = vmatpush.msra.mxu0 0.0
      %1105 = vmatpush.msra.mxu0 0.0
      %1106 = vmatpush.msra.mxu0 0.0
      %1107 = vmatpush.msra.mxu0 0.0
      %1108 = vmatpush.msra.mxu0 0.0
      %1109 = vmatpush.msra.mxu0 0.0
      %1110 = vmatpush.msra.mxu0 0.0
      %1111 = vmatpush.msra.mxu0 0.0
      %1112 = vmatpush.msra.mxu0 0.0
      %1113 = vmatpush.msra.mxu0 0.0
      %1114 = vmatpush.msra.mxu0 0.0
      %1115 = vmatpush.msra.mxu0 0.0
      %1116 = vmatpush.msra.mxu0 0.0
      %1117 = vmatpush.msra.mxu0 0.0
      %1118 = vmatpush.msra.mxu0 %v1098
      %1119 = vmatmul.f32.gmra.mxu0 %v1095
      %v1120 = vpop.f32.mrf.mxu0
      %v1121 = vadd.f32 0.0, %v1120
      %1122 = vdwg.mxu0
      %1123 = vmatpush.msra.mxu0 0.0
      %1124 = vmatpush.msra.mxu0 0.0
      %1125 = vmatpush.msra.mxu0 0.0
      %1126 = vmatpush.msra.mxu0 0.0
      %1127 = vmatpush.msra.mxu0 0.0
      %1128 = vmatpush.msra.mxu0 0.0
      %1129 = vmatpush.msra.mxu0 0.0
      %1130 = vmatpush.msra.mxu0 0.0
      %1131 = vmatpush.msra.mxu0 0.0
      %1132 = vmatpush.msra.mxu0 0.0
      %1133 = vmatpush.msra.mxu0 0.0
      %1134 = vmatpush.msra.mxu0 0.0
      %1135 = vmatpush.msra.mxu0 0.0
      %1136 = vmatpush.msra.mxu0 0.0
      %1137 = vmatpush.msra.mxu0 0.0
      %1138 = vmatpush.msra.mxu0 %v1101
      %1139 = vmatmul.f32.gmra.mxu0 %v1095
      %v1140 = vpop.f32.mrf.mxu0
      %v1141 = vadd.f32 0.0, %v1140
      %1142 = vdwg.mxu0
      %v1143 = vadd.f32 %v1070, %v1121
      %v1144 = vadd.f32 %v1090, %v1141
      %s1145 = scalar_lea.vmem %s3, 12
      %v1146 = vld [vmem:[%s1145] sm:$0xf]
      %v1148 = vsel %vm389, %v1146, 0
      %v1151 = vsel %vm393, %v965, 0
      %v1154 = vsel %vm393, %v966, 0
      %1156 = vmatpush.msra.mxu0 0.0
      %1157 = vmatpush.msra.mxu0 0.0
      %1158 = vmatpush.msra.mxu0 0.0
      %1159 = vmatpush.msra.mxu0 0.0
      %1160 = vmatpush.msra.mxu0 0.0
      %1161 = vmatpush.msra.mxu0 0.0
      %1162 = vmatpush.msra.mxu0 0.0
      %1163 = vmatpush.msra.mxu0 0.0
      %1164 = vmatpush.msra.mxu0 0.0
      %1165 = vmatpush.msra.mxu0 0.0
      %1166 = vmatpush.msra.mxu0 0.0
      %1167 = vmatpush.msra.mxu0 0.0
      %1168 = vmatpush.msra.mxu0 0.0
      %1169 = vmatpush.msra.mxu0 0.0
      %1170 = vmatpush.msra.mxu0 0.0
      %1171 = vmatpush.msra.mxu0 %v1151
      %1172 = vmatmul.f32.gmra.mxu0 %v1148
      %v1173 = vpop.f32.mrf.mxu0
      %v1174 = vadd.f32 0.0, %v1173
      %1175 = vdwg.mxu0
      %1176 = vmatpush.msra.mxu0 0.0
      %1177 = vmatpush.msra.mxu0 0.0
      %1178 = vmatpush.msra.mxu0 0.0
      %1179 = vmatpush.msra.mxu0 0.0
      %1180 = vmatpush.msra.mxu0 0.0
      %1181 = vmatpush.msra.mxu0 0.0
      %1182 = vmatpush.msra.mxu0 0.0
      %1183 = vmatpush.msra.mxu0 0.0
      %1184 = vmatpush.msra.mxu0 0.0
      %1185 = vmatpush.msra.mxu0 0.0
      %1186 = vmatpush.msra.mxu0 0.0
      %1187 = vmatpush.msra.mxu0 0.0
      %1188 = vmatpush.msra.mxu0 0.0
      %1189 = vmatpush.msra.mxu0 0.0
      %1190 = vmatpush.msra.mxu0 0.0
      %1191 = vmatpush.msra.mxu0 %v1154
      %1192 = vmatmul.f32.gmra.mxu0 %v1148
      %v1193 = vpop.f32.mrf.mxu0
      %v1194 = vadd.f32 0.0, %v1193
      %1195 = vdwg.mxu0
      %v1196 = vadd.f32 %v1143, %v1174
      %v1197 = vadd.f32 %v1144, %v1194
      %s1198 = scalar_lea.vmem %s3, 16
      %v1199 = vld [vmem:[%s1198] sm:$0xf]
      %v1201 = vsel %vm389, %v1199, 0
      %v1203 = vsel %vm393, %v897, 0
      %v1205 = vsel %vm393, %v898, 0
      %1207 = vmatpush.msra.mxu0 0.0
      %1208 = vmatpush.msra.mxu0 0.0
      %1209 = vmatpush.msra.mxu0 0.0
      %1210 = vmatpush.msra.mxu0 0.0
      %1211 = vmatpush.msra.mxu0 0.0
      %1212 = vmatpush.msra.mxu0 0.0
      %1213 = vmatpush.msra.mxu0 0.0
      %1214 = vmatpush.msra.mxu0 0.0
      %1215 = vmatpush.msra.mxu0 0.0
      %1216 = vmatpush.msra.mxu0 0.0
      %1217 = vmatpush.msra.mxu0 0.0
      %1218 = vmatpush.msra.mxu0 0.0
      %1219 = vmatpush.msra.mxu0 0.0
      %1220 = vmatpush.msra.mxu0 0.0
      %1221 = vmatpush.msra.mxu0 0.0
      %1222 = vmatpush.msra.mxu0 %v1203
      %1223 = vmatmul.f32.gmra.mxu0 %v1201
      %v1224 = vpop.f32.mrf.mxu0
      %v1225 = vadd.f32 0.0, %v1224
      %1226 = vdwg.mxu0
      %1227 = vmatpush.msra.mxu0 0.0
      %1228 = vmatpush.msra.mxu0 0.0
      %1229 = vmatpush.msra.mxu0 0.0
      %1230 = vmatpush.msra.mxu0 0.0
      %1231 = vmatpush.msra.mxu0 0.0
      %1232 = vmatpush.msra.mxu0 0.0
      %1233 = vmatpush.msra.mxu0 0.0
      %1234 = vmatpush.msra.mxu0 0.0
      %1235 = vmatpush.msra.mxu0 0.0
      %1236 = vmatpush.msra.mxu0 0.0
      %1237 = vmatpush.msra.mxu0 0.0
      %1238 = vmatpush.msra.mxu0 0.0
      %1239 = vmatpush.msra.mxu0 0.0
      %1240 = vmatpush.msra.mxu0 0.0
      %1241 = vmatpush.msra.mxu0 0.0
      %1242 = vmatpush.msra.mxu0 %v1205
      %1243 = vmatmul.f32.gmra.mxu0 %v1201
      %v1244 = vpop.f32.mrf.mxu0
      %v1245 = vadd.f32 0.0, %v1244
      %1246 = vdwg.mxu0
      %v1247 = vadd.f32 %v1196, %v1225
      %v1248 = vadd.f32 %v1197, %v1245
      %s1249 = scalar_lea.vmem %s3, 20
      %v1250 = vld [vmem:[%s1249] sm:$0xf]
      %v1252 = vsel %vm389, %v1250, 0
      %v1255 = vsel %vm393, %v967, 0
      %v1258 = vsel %vm393, %v968, 0
      %1260 = vmatpush.msra.mxu0 0.0
      %1261 = vmatpush.msra.mxu0 0.0
      %1262 = vmatpush.msra.mxu0 0.0
      %1263 = vmatpush.msra.mxu0 0.0
      %1264 = vmatpush.msra.mxu0 0.0
      %1265 = vmatpush.msra.mxu0 0.0
      %1266 = vmatpush.msra.mxu0 0.0
      %1267 = vmatpush.msra.mxu0 0.0
      %1268 = vmatpush.msra.mxu0 0.0
      %1269 = vmatpush.msra.mxu0 0.0
      %1270 = vmatpush.msra.mxu0 0.0
      %1271 = vmatpush.msra.mxu0 0.0
      %1272 = vmatpush.msra.mxu0 0.0
      %1273 = vmatpush.msra.mxu0 0.0
      %1274 = vmatpush.msra.mxu0 0.0
      %1275 = vmatpush.msra.mxu0 %v1255
      %1276 = vmatmul.f32.gmra.mxu0 %v1252
      %v1277 = vpop.f32.mrf.mxu0
      %v1278 = vadd.f32 0.0, %v1277
      %1279 = vdwg.mxu0
      %1280 = vmatpush.msra.mxu0 0.0
      %1281 = vmatpush.msra.mxu0 0.0
      %1282 = vmatpush.msra.mxu0 0.0
      %1283 = vmatpush.msra.mxu0 0.0
      %1284 = vmatpush.msra.mxu0 0.0
      %1285 = vmatpush.msra.mxu0 0.0
      %1286 = vmatpush.msra.mxu0 0.0
      %1287 = vmatpush.msra.mxu0 0.0
      %1288 = vmatpush.msra.mxu0 0.0
      %1289 = vmatpush.msra.mxu0 0.0
      %1290 = vmatpush.msra.mxu0 0.0
      %1291 = vmatpush.msra.mxu0 0.0
      %1292 = vmatpush.msra.mxu0 0.0
      %1293 = vmatpush.msra.mxu0 0.0
      %1294 = vmatpush.msra.mxu0 0.0
      %1295 = vmatpush.msra.mxu0 %v1258
      %1296 = vmatmul.f32.gmra.mxu0 %v1252
      %v1297 = vpop.f32.mrf.mxu0
      %v1298 = vadd.f32 0.0, %v1297
      %1299 = vdwg.mxu0
      %v1300 = vadd.f32 %v1247, %v1278
      %v1301 = vadd.f32 %v1248, %v1298
      %s1302 = scalar_lea.vmem %s3, 24
      %v1303 = vld [vmem:[%s1302] sm:$0xf]
      %v1305 = vsel %vm389, %v1303, 0
      %v1308 = vsel %vm393, %v989, 0
      %v1311 = vsel %vm393, %v990, 0
      %1313 = vmatpush.msra.mxu0 0.0
      %1314 = vmatpush.msra.mxu0 0.0
      %1315 = vmatpush.msra.mxu0 0.0
      %1316 = vmatpush.msra.mxu0 0.0
      %1317 = vmatpush.msra.mxu0 0.0
      %1318 = vmatpush.msra.mxu0 0.0
      %1319 = vmatpush.msra.mxu0 0.0
      %1320 = vmatpush.msra.mxu0 0.0
      %1321 = vmatpush.msra.mxu0 0.0
      %1322 = vmatpush.msra.mxu0 0.0
      %1323 = vmatpush.msra.mxu0 0.0
      %1324 = vmatpush.msra.mxu0 0.0
      %1325 = vmatpush.msra.mxu0 0.0
      %1326 = vmatpush.msra.mxu0 0.0
      %1327 = vmatpush.msra.mxu0 0.0
      %1328 = vmatpush.msra.mxu0 %v1308
      %1329 = vmatmul.f32.gmra.mxu0 %v1305
      %v1330 = vpop.f32.mrf.mxu0
      %v1331 = vadd.f32 0.0, %v1330
      %1332 = vdwg.mxu0
      %1333 = vmatpush.msra.mxu0 0.0
      %1334 = vmatpush.msra.mxu0 0.0
      %1335 = vmatpush.msra.mxu0 0.0
      %1336 = vmatpush.msra.mxu0 0.0
      %1337 = vmatpush.msra.mxu0 0.0
      %1338 = vmatpush.msra.mxu0 0.0
      %1339 = vmatpush.msra.mxu0 0.0
      %1340 = vmatpush.msra.mxu0 0.0
      %1341 = vmatpush.msra.mxu0 0.0
      %1342 = vmatpush.msra.mxu0 0.0
      %1343 = vmatpush.msra.mxu0 0.0
      %1344 = vmatpush.msra.mxu0 0.0
      %1345 = vmatpush.msra.mxu0 0.0
      %1346 = vmatpush.msra.mxu0 0.0
      %1347 = vmatpush.msra.mxu0 0.0
      %1348 = vmatpush.msra.mxu0 %v1311
      %1349 = vmatmul.f32.gmra.mxu0 %v1305
      %v1350 = vpop.f32.mrf.mxu0
      %v1351 = vadd.f32 0.0, %v1350
      %1352 = vdwg.mxu0
      %v1353 = vadd.f32 %v1300, %v1331
      %v1354 = vadd.f32 %v1301, %v1351
      %s1355 = scalar_lea.vmem %s3, 28
      %v1356 = vld [vmem:[%s1355] sm:$0xf]
      %v1358 = vsel %vm389, %v1356, 0
      %v1360 = vsel %vm393, %v921, 0
      %v1362 = vsel %vm393, %v922, 0
      %1364 = vmatpush.msra.mxu0 0.0
      %1365 = vmatpush.msra.mxu0 0.0
      %1366 = vmatpush.msra.mxu0 0.0
      %1367 = vmatpush.msra.mxu0 0.0
      %1368 = vmatpush.msra.mxu0 0.0
      %1369 = vmatpush.msra.mxu0 0.0
      %1370 = vmatpush.msra.mxu0 0.0
      %1371 = vmatpush.msra.mxu0 0.0
      %1372 = vmatpush.msra.mxu0 0.0
      %1373 = vmatpush.msra.mxu0 0.0
      %1374 = vmatpush.msra.mxu0 0.0
      %1375 = vmatpush.msra.mxu0 0.0
      %1376 = vmatpush.msra.mxu0 0.0
      %1377 = vmatpush.msra.mxu0 0.0
      %1378 = vmatpush.msra.mxu0 0.0
      %1379 = vmatpush.msra.mxu0 %v1360
      %1380 = vmatmul.f32.gmra.mxu0 %v1358
      %v1381 = vpop.f32.mrf.mxu0
      %v1382 = vadd.f32 0.0, %v1381
      %1383 = vdwg.mxu0
      %1384 = vmatpush.msra.mxu0 0.0
      %1385 = vmatpush.msra.mxu0 0.0
      %1386 = vmatpush.msra.mxu0 0.0
      %1387 = vmatpush.msra.mxu0 0.0
      %1388 = vmatpush.msra.mxu0 0.0
      %1389 = vmatpush.msra.mxu0 0.0
      %1390 = vmatpush.msra.mxu0 0.0
      %1391 = vmatpush.msra.mxu0 0.0
      %1392 = vmatpush.msra.mxu0 0.0
      %1393 = vmatpush.msra.mxu0 0.0
      %1394 = vmatpush.msra.mxu0 0.0
      %1395 = vmatpush.msra.mxu0 0.0
      %1396 = vmatpush.msra.mxu0 0.0
      %1397 = vmatpush.msra.mxu0 0.0
      %1398 = vmatpush.msra.mxu0 0.0
      %1399 = vmatpush.msra.mxu0 %v1362
      %1400 = vmatmul.f32.gmra.mxu0 %v1358
      %v1401 = vpop.f32.mrf.mxu0
      %v1402 = vadd.f32 0.0, %v1401
      %1403 = vdwg.mxu0
      %v1404 = vadd.f32 %v1353, %v1382
      %v1405 = vadd.f32 %v1354, %v1402
      %s1406 = scalar_lea.vmem %s3, 32
      %v1407 = vld [vmem:[%s1406] sm:$0xf]
      %v1409 = vsel %vm389, %v1407, 0
      %v1412 = vsel %vm393, %v991, 0
      %v1415 = vsel %vm393, %v992, 0
      %1417 = vmatpush.msra.mxu0 0.0
      %1418 = vmatpush.msra.mxu0 0.0
      %1419 = vmatpush.msra.mxu0 0.0
      %1420 = vmatpush.msra.mxu0 0.0
      %1421 = vmatpush.msra.mxu0 0.0
      %1422 = vmatpush.msra.mxu0 0.0
      %1423 = vmatpush.msra.mxu0 0.0
      %1424 = vmatpush.msra.mxu0 0.0
      %1425 = vmatpush.msra.mxu0 0.0
      %1426 = vmatpush.msra.mxu0 0.0
      %1427 = vmatpush.msra.mxu0 0.0
      %1428 = vmatpush.msra.mxu0 0.0
      %1429 = vmatpush.msra.mxu0 0.0
      %1430 = vmatpush.msra.mxu0 0.0
      %1431 = vmatpush.msra.mxu0 0.0
      %1432 = vmatpush.msra.mxu0 %v1412
      %1433 = vmatmul.f32.gmra.mxu0 %v1409
      %v1434 = vpop.f32.mrf.mxu0
      %v1435 = vadd.f32 0.0, %v1434
      %1436 = vdwg.mxu0
      %1437 = vmatpush.msra.mxu0 0.0
      %1438 = vmatpush.msra.mxu0 0.0
      %1439 = vmatpush.msra.mxu0 0.0
      %1440 = vmatpush.msra.mxu0 0.0
      %1441 = vmatpush.msra.mxu0 0.0
      %1442 = vmatpush.msra.mxu0 0.0
      %1443 = vmatpush.msra.mxu0 0.0
      %1444 = vmatpush.msra.mxu0 0.0
      %1445 = vmatpush.msra.mxu0 0.0
      %1446 = vmatpush.msra.mxu0 0.0
      %1447 = vmatpush.msra.mxu0 0.0
      %1448 = vmatpush.msra.mxu0 0.0
      %1449 = vmatpush.msra.mxu0 0.0
      %1450 = vmatpush.msra.mxu0 0.0
      %1451 = vmatpush.msra.mxu0 0.0
      %1452 = vmatpush.msra.mxu0 %v1415
      %1453 = vmatmul.f32.gmra.mxu0 %v1409
      %v1454 = vpop.f32.mrf.mxu0
      %v1455 = vadd.f32 0.0, %v1454
      %1456 = vdwg.mxu0
      %v1457 = vadd.f32 %v1404, %v1435
      %v1458 = vadd.f32 %v1405, %v1455
      %v1459 = vld [vmem:[%s4] sm:$0xf]
      %1461 = vset.pattern.permute.xlu0 0
      %1462 = vperm.xlu0 %1461, %v1459
      %v1463 = vpop.permute.xlu0 %1462
      %v1465 = vadd.f32 %v1457, %v1463
      %v1466 = vadd.f32 %v1458, %v1463
      %v1467 = vsel %vm393, %v1465, 0.0
      %v1468 = vsel %vm393, %v1466, 0.0
      %v1469 = vadd.f32 %v1467, %v1468
      %1470 = vadd.xlane.f32.xlu0 %v1469
      %v1471 = vpop.xlane.xlu0 %1470
      %v1472 = vmul.f32 %v1465, %v1465
      %v1473 = vmul.f32 %v1466, %v1466
      %v1474 = vsel %vm393, %v1472, 0.0
      %v1475 = vsel %vm393, %v1473, 0.0
      %v1476 = vadd.f32 %v1474, %v1475
      %1477 = vadd.xlane.f32.xlu0 %v1476
      %v1478 = vpop.xlane.xlu0 %1477
      %v1479 = vmul.f32 %v1471, 0.00390625
      %v1480 = vmul.f32 %v1478, 0.00390625
      %v1481 = vmul.f32 %v1479, %v1479
      %v1482 = vsub.f32 %v1480, %v1481
      %v1483 = vmax.f32 %v1482, 0.0
      %v1484 = vsub.f32 %v1465, %v1479
      %v1485 = vsub.f32 %v1466, %v1479
      %v1486 = vadd.f32 %v1483, 1e-05
      %v1487 = vrsqrt.pop %v1486
      %v1488 = vmul.f32 %v1487, %v1486
      %v1489 = vmul.f32 %v1488, %v1487
      %v1490 = vmul.f32 0.5, %v1489
      %v1491 = vsub.f32 1.5, %v1490
      %v1492 = vmul.f32 %v1487, %v1491
      %vm1493 = vweird.f32 %v1486
      %vm1494 = vweird.f32 %v1487
      %vm1495 = vmor %vm1493, %vm1494
      %v1496 = vsel %vm1495, %v1487, %v1492
      %v1497 = vmul.f32 %v1484, %v1496
      %v1498 = vmul.f32 %v1485, %v1496
      %v1501 = vrot.slane %v1498, 4
      %v1502 = vsel %vm393, %v1497, %v1501
      %v1504 = vadd.f32 %v225, %v1502
      %1505 = vst [vmem:[%s224] sm:$0xff] %v1504
      %p1506 = scmp.lt.s32.totalorder %s16, 1
      %s1507 = scalar_select %p1506, %s16, 1
      %s1508 = smul.addr %s1507, 2
      %s1509 = smul.addr %s1508, 4
      %s1510 = scalar_lea.vmem %s5, %s1509
      // Predicated region
      $region41: #{residual_block.1} parent=39 // pred_check
        %p1511 = pneg %p144
      $region42: #{residual_block.1} parent=39 // pred_check_branch
        %1513 = sbr.rel (%p1511) target = $region44
      $region43: #{residual_block.1} parent=39 // pred_region
        _
      $region44: #{residual_block.1} parent=39 // pred_fallthru
        _
    $region40: #{residual_block.1} parent=5 // pred_fallthru
      _
    %p1514 = scmp.le.s32.totalorder 2, %s11
    // Predicated region
    $region45: #{residual_block.1} parent=5 // pred_check
      %p1515 = pneg %p1514
    $region46: #{residual_block.1} parent=5 // pred_check_branch
      %1517 = sbr.rel (%p1515) target = $region48
    $region47: #{residual_block.1} parent=5 // pred_region
      %s1518 = ssub.s32 %s11, 2
      // Predicated region
      $region49: #{residual_block.1} parent=47 // pred_check
        %p1519 = pneg %p150
      $region50: #{residual_block.1} parent=47 // pred_check_branch
        %1521 = sbr.rel (%p1519) target = $region52
      $region51: #{residual_block.1} parent=47 // pred_region
        %p1522 = scmp.lt.s32.totalorder %s17, 1
        %s1523 = scalar_select %p1522, %s17, 1
        %s1524 = smul.addr %s1523, 2
        %s1525 = smul.addr %s1524, 4
        %s1526 = scalar_lea.vmem %s5, %s1525
      $region52: #{residual_block.1} parent=47 // pred_fallthru
        _
    $region48: #{residual_block.1} parent=5 // pred_fallthru
      _
  $region6: #{residual_block.1} parent=0 // loop_footer
    %s15 = sadd.s32 1, %s11
  $region7: #{residual_block.1} parent=0 // loop_footer_branch
    %10 = sbr.rel target = $region3
  $region8: #{residual_block.1} parent=0 // loop_exit
    _

</llo_original>
